<compile_context>
chip_gen: v5e
topology: v5e:2x2
jax: 0.10.0
libtpu: 0.0.40
codegen_flags: <defaults>
</compile_context>

<pallas_src>
import jax
import jax.numpy as jnp
from jax.experimental import pallas as pl
from jax.experimental.pallas import tpu as pltpu

LANE = 128           # lane width / padding granularity for layer widths
TB_TARGET = 512      # batch-tile rows per grid step (review: 512-1024)
NUM_CLASSES = 10     # logical output width of fc3


def _round_up(n, m):
    return ((n + m - 1) // m) * m


def _pad2(a, rows, cols):
    return jnp.pad(a, ((0, rows - a.shape[0]), (0, cols - a.shape[1])))


# ----------------------------------------------------------------------------
# Kernel: one batch tile of x against the VMEM-resident padded weights.
# f32 x is cast to bf16 in-kernel (MXU rate, no wrapper HBM pass); f32
# accumulation; f32 bias/ReLU on the VPU; bf16 lane-dense output store.
# ----------------------------------------------------------------------------
def fffc_kernel(x_ref, w1_ref, b1_ref, w2_ref, b2_ref, w3_ref, b3_ref, o_ref):
    x = x_ref[...].astype(jnp.bfloat16)              # VPU cast, hides under MXU
    # fc1 + ReLU
    h1 = jnp.dot(x, w1_ref[...], preferred_element_type=jnp.float32)
    h1 = jnp.maximum(h1 + b1_ref[...], 0.0)
    # fc2 + ReLU
    h2 = jnp.dot(h1.astype(jnp.bfloat16), w2_ref[...],
                 preferred_element_type=jnp.float32)
    h2 = jnp.maximum(h2 + b2_ref[...], 0.0)
    # fc3 (no activation)
    h3 = jnp.dot(h2.astype(jnp.bfloat16), w3_ref[...],
                 preferred_element_type=jnp.float32)
    o_ref[...] = (h3 + b3_ref[...]).astype(o_ref.dtype)


# ----------------------------------------------------------------------------
# Parameter setup: pad only the OUTPUT widths to multiples of 128 (500->512,
# 200->256, 10->128); the input feature dim F stays unpadded. Zero padding is
# exact under ReLU. Weights cast to bf16 once; biases stay f32.
# ----------------------------------------------------------------------------
def prepare_params(w1, b1, w2, b2, w3, b3):
    F, H1 = w1.shape
    H2 = w2.shape[1]
    O = w3.shape[1]
    H1p, H2p, Op = (_round_up(d, LANE) for d in (H1, H2, O))
    w1p = _pad2(w1, F, H1p).astype(jnp.bfloat16)
    w2p = _pad2(w2, H1p, H2p).astype(jnp.bfloat16)
    w3p = _pad2(w3, H2p, Op).astype(jnp.bfloat16)
    b1p = _pad2(b1, 1, H1p).astype(jnp.float32)
    b2p = _pad2(b2, 1, H2p).astype(jnp.float32)
    b3p = _pad2(b3, 1, Op).astype(jnp.float32)
    return w1p, b1p, w2p, b2p, w3p, b3p


def _batch_tiling(B):
    """Pick (TB, grid): large tiles to amortize per-step pipeline overhead, and
    an even grid length so v7x shards the parallel axis across both TCs."""
    TB = TB_TARGET
    if B < 2 * TB:
        # Small batch: aim for 2 roughly equal tiles, each a multiple of 128.
        TB = max(LANE, _round_up(pl.cdiv(B, 2), LANE))
    grid = pl.cdiv(B, TB)
    if grid % 2:
        grid += 1            # keep even for v7x megacore; harmless elsewhere
    return TB, grid


@jax.jit
def fffc_forward(x, w1p, b1p, w2p, b2p, w3p, b3p):
    """x: (B, F) f32, unpadded. Padded/bf16 params from prepare_params."""
    B, F = x.shape
    H1p = w1p.shape[1]
    H2p = w2p.shape[1]
    Op = w3p.shape[1]

    TB, grid = _batch_tiling(B)
    Bp = TB * grid
    xp = x if Bp == B else jnp.pad(x, ((0, Bp - B), (0, 0)))   # batch pad only

    out = pl.pallas_call(
        fffc_kernel,
        out_shape=jax.ShapeDtypeStruct((Bp, Op), jnp.bfloat16),
        grid_spec=pltpu.PrefetchScalarGridSpec(
            num_scalar_prefetch=0,
            grid=(grid,),
            in_specs=[
                pl.BlockSpec((TB, F), lambda i: (i, 0)),     # x tile (pipelined)
                pl.BlockSpec((F, H1p), lambda i: (0, 0)),    # weights: resident
                pl.BlockSpec((1, H1p), lambda i: (0, 0)),
                pl.BlockSpec((H1p, H2p), lambda i: (0, 0)),
                pl.BlockSpec((1, H2p), lambda i: (0, 0)),
                pl.BlockSpec((H2p, Op), lambda i: (0, 0)),
                pl.BlockSpec((1, Op), lambda i: (0, 0)),
            ],
            out_specs=pl.BlockSpec((TB, Op), lambda i: (i, 0)),
        ),
        compiler_params=pltpu.CompilerParams(
            dimension_semantics=("parallel",),
            vmem_limit_bytes=32 * 1024 * 1024,
        ),
    )(xp, w1p, b1p, w2p, b2p, w3p, b3p)

    # Tiny (B, 10) slice; restore the module's f32 logits dtype.
    return out[:B, :NUM_CLASSES].astype(jnp.float32)


# ----------------------------------------------------------------------------
# Init + references
# ----------------------------------------------------------------------------
def init_params(key, im_size):
    """Deterministic init mimicking torch.nn.Linear default (uniform +-1/sqrt(fan_in)).
    Weights stored as (in, out) == transpose of PyTorch's (out, in)."""
    dims = [im_size ** 2, 500, 200, NUM_CLASSES]
    params = []
    keys = jax.random.split(key, 6)
    for i in range(3):
        fan_in, fan_out = dims[i], dims[i + 1]
        bound = 1.0 / (fan_in ** 0.5)
        w = jax.random.uniform(keys[2 * i], (fan_in, fan_out), jnp.float32,
                               minval=-bound, maxval=bound)
        b = jax.random.uniform(keys[2 * i + 1], (1, fan_out), jnp.float32,
                               minval=-bound, maxval=bound)
        params.extend([w, b])
    return params


def reference_forward_f32(x, w1, b1, w2, b2, w3, b3):
    h1 = jnp.maximum(x @ w1 + b1, 0.0)
    h2 = jnp.maximum(h1 @ w2 + b2, 0.0)
    return h2 @ w3 + b3


def reference_forward_bf16(x, w1p, b1p, w2p, b2p, w3p, b3p):
    """Matches kernel numerics: bf16 operands, f32 accumulation, f32 bias/ReLU,
    bf16 output store."""
    xb = x.astype(jnp.bfloat16)
    h1 = jnp.maximum(jnp.dot(xb, w1p, preferred_element_type=jnp.float32) + b1p, 0.0)
    h2 = jnp.maximum(jnp.dot(h1.astype(jnp.bfloat16), w2p,
                             preferred_element_type=jnp.float32) + b2p, 0.0)
    h3 = jnp.dot(h2.astype(jnp.bfloat16), w3p,
                 preferred_element_type=jnp.float32) + b3p
    return h3.astype(jnp.bfloat16)[:, :NUM_CLASSES].astype(jnp.float32)


def _check(x, padded, raw_params):
    out = jax.block_until_ready(fffc_forward(x, *padded))
    assert out.shape == (x.shape[0], NUM_CLASSES)
    # Tight check vs a reference with identical bf16/f32 numerics
    # (tolerance covers one bf16-ulp rounding divergence of the output store).
    ref_bf16 = reference_forward_bf16(x, *padded)
    assert jnp.allclose(out, ref_bf16, atol=2e-2, rtol=2e-2), \
        "mismatch vs bf16-matched reference"
    # Loose sanity check vs the pure-f32 reference (bf16 rounding error only).
    ref_f32 = reference_forward_f32(x, *raw_params)
    assert jnp.allclose(out, ref_f32, atol=7.5e-2, rtol=5e-2), \
        "mismatch vs f32 reference beyond bf16 tolerance"
    return out


if __name__ == "__main__":
    key = jax.random.PRNGKey(0)
    k_x, k_x2, k_p = jax.random.split(key, 3)

    im_size = 16          # small, consistent with the module (MNIST would be 28)
    raw_params = init_params(k_p, im_size)
    padded = prepare_params(*raw_params)

    # Small example input (primary test).
    x_small = jax.random.normal(k_x, (8, im_size ** 2), jnp.float32)
    _check(x_small, padded, raw_params)

    # Larger batch to exercise the TB=512, 2-step grid steady-state path.
    x_large = jax.random.normal(k_x2, (1024, im_size ** 2), jnp.float32)
    _check(x_large, padded, raw_params)

    print("KERNEL_OK")
</pallas_src>

<mosaic_0001>
module attributes {stable_mosaic.version = 11 : i64} {
  func.func @fffc_kernel(%arg0: i32, %arg1: memref<128x256xf32, #tpu.memory_space<vmem>>, %arg2: memref<256x512xbf16, #tpu.memory_space<vmem>>, %arg3: memref<1x512xf32, #tpu.memory_space<vmem>>, %arg4: memref<512x256xbf16, #tpu.memory_space<vmem>>, %arg5: memref<1x256xf32, #tpu.memory_space<vmem>>, %arg6: memref<256x128xbf16, #tpu.memory_space<vmem>>, %arg7: memref<1x128xf32, #tpu.memory_space<vmem>>, %arg8: memref<128x128xbf16, #tpu.memory_space<vmem>>) attributes {dimension_semantics = [#tpu.dimension_semantics<parallel>], iteration_bounds = array<i64: 2>, scalar_prefetch = 0 : i64, scratch_operands = 0 : i64, tpu.core_type = #tpu.core_type<tc>, window_params = [{transform_indices = @transform_0, window_bounds = array<i64: 128, 256>}, {pipeline_mode = #tpu.pipeline_mode<synchronous>, transform_indices = @transform_1, window_bounds = array<i64: 256, 512>}, {pipeline_mode = #tpu.pipeline_mode<synchronous>, transform_indices = @transform_2, window_bounds = array<i64: 1, 512>}, {pipeline_mode = #tpu.pipeline_mode<synchronous>, transform_indices = @transform_3, window_bounds = array<i64: 512, 256>}, {pipeline_mode = #tpu.pipeline_mode<synchronous>, transform_indices = @transform_4, window_bounds = array<i64: 1, 256>}, {pipeline_mode = #tpu.pipeline_mode<synchronous>, transform_indices = @transform_5, window_bounds = array<i64: 256, 128>}, {pipeline_mode = #tpu.pipeline_mode<synchronous>, transform_indices = @transform_6, window_bounds = array<i64: 1, 128>}, {transform_indices = @transform_7, window_bounds = array<i64: 128, 128>}]} {
    %c0 = arith.constant 0 : index
    %c0_0 = arith.constant 0 : index
    %0 = vector.load %arg1[%c0, %c0_0] : memref<128x256xf32, #tpu.memory_space<vmem>>, vector<128x256xf32>
    %1 = arith.truncf %0 : vector<128x256xf32> to vector<128x256xbf16>
    %c0_1 = arith.constant 0 : index
    %c0_2 = arith.constant 0 : index
    %2 = vector.load %arg2[%c0_1, %c0_2] : memref<256x512xbf16, #tpu.memory_space<vmem>>, vector<256x512xbf16>
    %cst = arith.constant dense<0.000000e+00> : vector<128x512xf32>
    %3 = tpu.matmul %1, %2, %cst {dimension_numbers = #tpu.dot_dimension_numbers<[1], [0], [0], [1], [0, 0, 1, 1], [], []>} : vector<128x256xbf16>, vector<256x512xbf16>, vector<128x512xf32> -> vector<128x512xf32>
    %c0_3 = arith.constant 0 : index
    %c0_4 = arith.constant 0 : index
    %4 = vector.load %arg3[%c0_3, %c0_4] : memref<1x512xf32, #tpu.memory_space<vmem>>, vector<1x512xf32>
    %5 = vector.broadcast %4 : vector<1x512xf32> to vector<128x512xf32>
    %6 = arith.addf %3, %5 : vector<128x512xf32>
    %cst_5 = arith.constant 0.000000e+00 : f32
    %7 = vector.broadcast %cst_5 : f32 to vector<128x512xf32>
    %8 = arith.maximumf %6, %7 : vector<128x512xf32>
    %9 = arith.truncf %8 : vector<128x512xf32> to vector<128x512xbf16>
    %c0_6 = arith.constant 0 : index
    %c0_7 = arith.constant 0 : index
    %10 = vector.load %arg4[%c0_6, %c0_7] : memref<512x256xbf16, #tpu.memory_space<vmem>>, vector<512x256xbf16>
    %cst_8 = arith.constant dense<0.000000e+00> : vector<128x256xf32>
    %11 = tpu.matmul %9, %10, %cst_8 {dimension_numbers = #tpu.dot_dimension_numbers<[1], [0], [0], [1], [0, 0, 1, 1], [], []>} : vector<128x512xbf16>, vector<512x256xbf16>, vector<128x256xf32> -> vector<128x256xf32>
    %c0_9 = arith.constant 0 : index
    %c0_10 = arith.constant 0 : index
    %12 = vector.load %arg5[%c0_9, %c0_10] : memref<1x256xf32, #tpu.memory_space<vmem>>, vector<1x256xf32>
    %13 = vector.broadcast %12 : vector<1x256xf32> to vector<128x256xf32>
    %14 = arith.addf %11, %13 : vector<128x256xf32>
    %cst_11 = arith.constant 0.000000e+00 : f32
    %15 = vector.broadcast %cst_11 : f32 to vector<128x256xf32>
    %16 = arith.maximumf %14, %15 : vector<128x256xf32>
    %17 = arith.truncf %16 : vector<128x256xf32> to vector<128x256xbf16>
    %c0_12 = arith.constant 0 : index
    %c0_13 = arith.constant 0 : index
    %18 = vector.load %arg6[%c0_12, %c0_13] : memref<256x128xbf16, #tpu.memory_space<vmem>>, vector<256x128xbf16>
    %cst_14 = arith.constant dense<0.000000e+00> : vector<128x128xf32>
    %19 = tpu.matmul %17, %18, %cst_14 {dimension_numbers = #tpu.dot_dimension_numbers<[1], [0], [0], [1], [0, 0, 1, 1], [], []>} : vector<128x256xbf16>, vector<256x128xbf16>, vector<128x128xf32> -> vector<128x128xf32>
    %c0_15 = arith.constant 0 : index
    %c0_16 = arith.constant 0 : index
    %20 = vector.load %arg7[%c0_15, %c0_16] : memref<1x128xf32, #tpu.memory_space<vmem>>, vector<1x128xf32>
    %21 = vector.broadcast %20 : vector<1x128xf32> to vector<128x128xf32>
    %22 = arith.addf %19, %21 : vector<128x128xf32>
    %23 = arith.truncf %22 : vector<128x128xf32> to vector<128x128xbf16>
    %c0_17 = arith.constant 0 : index
    %c0_18 = arith.constant 0 : index
    %24 = vector.load %arg8[%c0_17, %c0_18] : memref<128x128xbf16, #tpu.memory_space<vmem>>, vector<128x128xbf16>
    tpu.vector_store %arg8[%c0_17, %c0_18], %23 {strides = array<i32>} : memref<128x128xbf16, #tpu.memory_space<vmem>>, vector<128x128xbf16>,
    return
  }
  func.func @transform_0(%arg0: i32) -> (i32, i32) {
    %c0_i32 = arith.constant 0 : i32
    %c0_i32_0 = arith.constant 0 : i32
    return %arg0, %c0_i32 : i32, i32
  }
  func.func @transform_1(%arg0: i32) -> (i32, i32) {
    %c0_i32 = arith.constant 0 : i32
    %c0_i32_0 = arith.constant 0 : i32
    %c0_i32_1 = arith.constant 0 : i32
    return %c0_i32, %c0_i32_0 : i32, i32
  }
  func.func @transform_2(%arg0: i32) -> (i32, i32) {
    %c0_i32 = arith.constant 0 : i32
    %c0_i32_0 = arith.constant 0 : i32
    %c0_i32_1 = arith.constant 0 : i32
    return %c0_i32, %c0_i32_0 : i32, i32
  }
  func.func @transform_3(%arg0: i32) -> (i32, i32) {
    %c0_i32 = arith.constant 0 : i32
    %c0_i32_0 = arith.constant 0 : i32
    %c0_i32_1 = arith.constant 0 : i32
    return %c0_i32, %c0_i32_0 : i32, i32
  }
  func.func @transform_4(%arg0: i32) -> (i32, i32) {
    %c0_i32 = arith.constant 0 : i32
    %c0_i32_0 = arith.constant 0 : i32
    %c0_i32_1 = arith.constant 0 : i32
    return %c0_i32, %c0_i32_0 : i32, i32
  }
  func.func @transform_5(%arg0: i32) -> (i32, i32) {
    %c0_i32 = arith.constant 0 : i32
    %c0_i32_0 = arith.constant 0 : i32
    %c0_i32_1 = arith.constant 0 : i32
    return %c0_i32, %c0_i32_0 : i32, i32
  }
  func.func @transform_6(%arg0: i32) -> (i32, i32) {
    %c0_i32 = arith.constant 0 : i32
    %c0_i32_0 = arith.constant 0 : i32
    %c0_i32_1 = arith.constant 0 : i32
    return %c0_i32, %c0_i32_0 : i32, i32
  }
  func.func @transform_7(%arg0: i32) -> (i32, i32) {
    %c0_i32 = arith.constant 0 : i32
    %c0_i32_0 = arith.constant 0 : i32
    return %arg0, %c0_i32 : i32, i32
  }
}

</mosaic_0001>

<llo_original>
// kernel: fffc_forward.1
$region0: #{fffc_forward.1}
  #allocation0 [shape = 'u32[]', space=smem, size = 0x4, offset = 0x4, fixed_abs, tag = 'smem constant byte address 0x4 - core index']
  #allocation1 [shape = 'u32[72,128]{1,0:T(1,128)}', space=vmem, size = 0x9000, scoped, tag = 'internal scratch']
  %s0 = inlined_call_operand.vmem [shape: f32[256,256], index: 0, kind: input, shape index: {}]
  %s1 = inlined_call_operand.vmem [shape: bf16[256,512], index: 1, kind: input, shape index: {}]
  %s2 = inlined_call_operand.vmem [shape: f32[1,512], index: 2, kind: input, shape index: {}]
  %s3 = inlined_call_operand.hbm [shape: bf16[512,256], index: 3, kind: input, shape index: {}]
  %s4 = inlined_call_operand.vmem [shape: f32[1,256], index: 4, kind: input, shape index: {}]
  %s5 = inlined_call_operand.hbm [shape: bf16[256,128], index: 5, kind: input, shape index: {}]
  %s6 = inlined_call_operand.vmem [shape: f32[1,128], index: 6, kind: input, shape index: {}]
  %s7 = inlined_call_operand.vmem [shape: bf16[256,128], index: 7, kind: output, shape index: {}]
  %s8 = sld [smem:[#allocation0]]
  $region69: #{fffc_forward.1} parent=0
    _
  %s10 = ssub.s32 1, %s8
  %s11 = scalar_select 0, %s10, %s8
  $region1: #{fffc_forward.1} parent=0
    #allocation2 [shape = 'u8[262144]{0}', space=vmem, size = 0x40000, scoped, tag = 'input window, operand 3, single buffered']
    #allocation3 [shape = 's32[2]{0}', space=sflag, size = 0x8, scoped, tag = 'scoped memory for fffc_forward.1']
    #allocation4 [shape = 'u8[65536]{0}', space=vmem, size = 0x10000, scoped, tag = 'input window, operand 5, single buffered']
    #allocation5 [shape = 's32[1]{0}', space=sflag, size = 0x4, scoped, tag = 'scoped memory for fffc_forward.1']
    %12 = vsyncpa [#allocation3], 0
    %13 = vsyncpa [#allocation5], 0
    loop: start=0, step=1, limit=4
    $region2: #{fffc_forward.1} parent=1 // loop_pre_header
      _
    $region3: #{fffc_forward.1} parent=1 // loop_header
      %s15 = sphi 0, %s19
      %p16 = scmp.ge.s32.totalorder %s15, 4
      %s25 = sphi 0, %s27
      %s28 = sphi 0, %s25
      %s29 = sphi 0, %s28
      %s45 = sphi 0, %s29
      %s49 = sphi 0, %s49
      %s51 = sphi 0, %s49
      %s52 = sphi 0, %s51
      %s66 = sphi 0, %s52
      %s70 = sphi 0, %s70
      %s72 = sphi 0, %s70
      %s73 = sphi 0, %s72
      %s87 = sphi 0, %s73
      %s91 = sphi 0, %s91
      %s93 = sphi 0, %s91
      %s94 = sphi 0, %s93
      %s108 = sphi 0, %s94
      %s112 = sphi 0, %s112
      %s114 = sphi 0, %s112
      %s115 = sphi 0, %s114
      %s129 = sphi 0, %s115
      %s133 = sphi 0, %s133
      %s135 = sphi 0, %s133
      %s136 = sphi 0, %s135
      %s150 = sphi 0, %s136
      %s154 = sphi 0, %s154
      %s156 = sphi 0, %s154
      %s157 = sphi 0, %s156
      %s171 = sphi 0, %s157
      %s177 = sphi 0, %s179
      %s180 = sphi 0, %s177
      %s181 = sphi 0, %s180
      %s197 = sphi 0, %s181
    $region4: #{fffc_forward.1} parent=1 // loop_header_branch
      %18 = sbr.rel (%p16) target = $region8
    $region5: #{fffc_forward.1} parent=1 // loop_body
      %s20 = ssub.s32 %s15, 1
      %s21 = ssub.s32 %s15, 2
      %s22 = sadd.s32 %s15, 1
      %s23 = ssub.s32 %s15, %s22
      %p24 = scmp.eq.s32.totalorder %s23, 0
      %s26 = sadd.s32 %s25, 1
      %s27 = scalar_select %p24, %s25, %s26
      %p30 = pneg %p24
      %p31 = scmp.eq.s32.totalorder %s15, 1
      %p32 = por %p30, %p31
      %p33 = scmp.ne.s32.totalorder %s25, %s28
      %p34 = scmp.eq.s32.totalorder %s15, 0
      %p35 = por %p33, %p34
      %p36 = scmp.ne.s32.totalorder %s25, %s28
      %p37 = scmp.eq.s32.totalorder %s20, 1
      %p38 = por %p36, %p37
      %p39 = scmp.ne.s32.totalorder %s28, %s29
      %p40 = scmp.eq.s32.totalorder %s20, 0
      %p41 = por %p39, %p40
      %p42 = scmp.ne.s32.totalorder %s28, %s29
      %p43 = scmp.eq.s32.totalorder %s21, 1
      %p44 = por %p42, %p43
      %p46 = scmp.ne.s32.totalorder %s29, %s45
      %p47 = scmp.eq.s32.totalorder %s21, 0
      %p48 = por %p46, %p47
      %s50 = sadd.s32 %s49, 1
      %p53 = scmp.eq.s32.totalorder %s15, 1
      %p54 = scmp.ne.s32.totalorder %s49, %s51
      %p55 = scmp.eq.s32.totalorder %s15, 0
      %p56 = por %p54, %p55
      %p57 = scmp.ne.s32.totalorder %s49, %s51
      %p58 = scmp.eq.s32.totalorder %s20, 1
      %p59 = por %p57, %p58
      %p60 = scmp.ne.s32.totalorder %s51, %s52
      %p61 = scmp.eq.s32.totalorder %s20, 0
      %p62 = por %p60, %p61
      %p63 = scmp.ne.s32.totalorder %s51, %s52
      %p64 = scmp.eq.s32.totalorder %s21, 1
      %p65 = por %p63, %p64
      %p67 = scmp.ne.s32.totalorder %s52, %s66
      %p68 = scmp.eq.s32.totalorder %s21, 0
      %p69 = por %p67, %p68
      %s71 = sadd.s32 %s70, 1
      %p74 = scmp.eq.s32.totalorder %s15, 1
      %p75 = scmp.ne.s32.totalorder %s70, %s72
      %p76 = scmp.eq.s32.totalorder %s15, 0
      %p77 = por %p75, %p76
      %p78 = scmp.ne.s32.totalorder %s70, %s72
      %p79 = scmp.eq.s32.totalorder %s20, 1
      %p80 = por %p78, %p79
      %p81 = scmp.ne.s32.totalorder %s72, %s73
      %p82 = scmp.eq.s32.totalorder %s20, 0
      %p83 = por %p81, %p82
      %p84 = scmp.ne.s32.totalorder %s72, %s73
      %p85 = scmp.eq.s32.totalorder %s21, 1
      %p86 = por %p84, %p85
      %p88 = scmp.ne.s32.totalorder %s73, %s87
      %p89 = scmp.eq.s32.totalorder %s21, 0
      %p90 = por %p88, %p89
      %s92 = sadd.s32 %s91, 1
      %p95 = scmp.eq.s32.totalorder %s15, 1
      %p96 = scmp.ne.s32.totalorder %s91, %s93
      %p97 = scmp.eq.s32.totalorder %s15, 0
      %p98 = por %p96, %p97
      %p99 = scmp.ne.s32.totalorder %s91, %s93
      %p100 = scmp.eq.s32.totalorder %s20, 1
      %p101 = por %p99, %p100
      %p102 = scmp.ne.s32.totalorder %s93, %s94
      %p103 = scmp.eq.s32.totalorder %s20, 0
      %p104 = por %p102, %p103
      %p105 = scmp.ne.s32.totalorder %s93, %s94
      %p106 = scmp.eq.s32.totalorder %s21, 1
      %p107 = por %p105, %p106
      %p109 = scmp.ne.s32.totalorder %s94, %s108
      %p110 = scmp.eq.s32.totalorder %s21, 0
      %p111 = por %p109, %p110
      %s113 = sadd.s32 %s112, 1
      %p116 = scmp.eq.s32.totalorder %s15, 1
      %p117 = scmp.ne.s32.totalorder %s112, %s114
      %p118 = scmp.eq.s32.totalorder %s15, 0
      %p119 = por %p117, %p118
      %p120 = scmp.ne.s32.totalorder %s112, %s114
      %p121 = scmp.eq.s32.totalorder %s20, 1
      %p122 = por %p120, %p121
      %p123 = scmp.ne.s32.totalorder %s114, %s115
      %p124 = scmp.eq.s32.totalorder %s20, 0
      %p125 = por %p123, %p124
      %p126 = scmp.ne.s32.totalorder %s114, %s115
      %p127 = scmp.eq.s32.totalorder %s21, 1
      %p128 = por %p126, %p127
      %p130 = scmp.ne.s32.totalorder %s115, %s129
      %p131 = scmp.eq.s32.totalorder %s21, 0
      %p132 = por %p130, %p131
      %s134 = sadd.s32 %s133, 1
      %p137 = scmp.eq.s32.totalorder %s15, 1
      %p138 = scmp.ne.s32.totalorder %s133, %s135
      %p139 = scmp.eq.s32.totalorder %s15, 0
      %p140 = por %p138, %p139
      %p141 = scmp.ne.s32.totalorder %s133, %s135
      %p142 = scmp.eq.s32.totalorder %s20, 1
      %p143 = por %p141, %p142
      %p144 = scmp.ne.s32.totalorder %s135, %s136
      %p145 = scmp.eq.s32.totalorder %s20, 0
      %p146 = por %p144, %p145
      %p147 = scmp.ne.s32.totalorder %s135, %s136
      %p148 = scmp.eq.s32.totalorder %s21, 1
      %p149 = por %p147, %p148
      %p151 = scmp.ne.s32.totalorder %s136, %s150
      %p152 = scmp.eq.s32.totalorder %s21, 0
      %p153 = por %p151, %p152
      %s155 = sadd.s32 %s154, 1
      %p158 = scmp.eq.s32.totalorder %s15, 1
      %p159 = scmp.ne.s32.totalorder %s154, %s156
      %p160 = scmp.eq.s32.totalorder %s15, 0
      %p161 = por %p159, %p160
      %p162 = scmp.ne.s32.totalorder %s154, %s156
      %p163 = scmp.eq.s32.totalorder %s20, 1
      %p164 = por %p162, %p163
      %p165 = scmp.ne.s32.totalorder %s156, %s157
      %p166 = scmp.eq.s32.totalorder %s20, 0
      %p167 = por %p165, %p166
      %p168 = scmp.ne.s32.totalorder %s156, %s157
      %p169 = scmp.eq.s32.totalorder %s21, 1
      %p170 = por %p168, %p169
      %p172 = scmp.ne.s32.totalorder %s157, %s171
      %p173 = scmp.eq.s32.totalorder %s21, 0
      %p174 = por %p172, %p173
      %s175 = ssub.s32 %s15, %s22
      %p176 = scmp.eq.s32.totalorder %s175, 0
      %s178 = sadd.s32 %s177, 1
      %s179 = scalar_select %p176, %s177, %s178
      %p182 = pneg %p176
      %p183 = scmp.eq.s32.totalorder %s15, 1
      %p184 = por %p182, %p183
      %p185 = scmp.ne.s32.totalorder %s177, %s180
      %p186 = scmp.eq.s32.totalorder %s15, 0
      %p187 = por %p185, %p186
      %p188 = scmp.ne.s32.totalorder %s177, %s180
      %p189 = scmp.eq.s32.totalorder %s20, 1
      %p190 = por %p188, %p189
      %p191 = scmp.ne.s32.totalorder %s180, %s181
      %p192 = scmp.eq.s32.totalorder %s20, 0
      %p193 = por %p191, %p192
      %p194 = scmp.ne.s32.totalorder %s180, %s181
      %p195 = scmp.eq.s32.totalorder %s21, 1
      %p196 = por %p194, %p195
      %p198 = scmp.ne.s32.totalorder %s181, %s197
      %p199 = scmp.eq.s32.totalorder %s21, 0
      %p200 = por %p198, %p199
      %p201 = scmp.le.s32.totalorder 1, %s15
      %p202 = scmp.lt.s32.totalorder %s15, 3
      %p203 = pnand %p201, %p202
      %p204 = pneg %p203
      // Predicated region
      $region9: #{fffc_forward.1} parent=5 // pred_check
        _
      $region10: #{fffc_forward.1} parent=5 // pred_check_branch
        %206 = sbr.rel (%p203) target = $region12
      $region11: #{fffc_forward.1} parent=5 // pred_region
        %s207 = ssub.s32 %s15, 1
        // Predicated region
        $region13: #{fffc_forward.1} parent=11 // pred_check
          %p208 = pneg %p62
        $region14: #{fffc_forward.1} parent=11 // pred_check_branch
          %210 = sbr.rel (%p208) target = $region16
        $region15: #{fffc_forward.1} parent=11 // pred_region
          _
        $region16: #{fffc_forward.1} parent=11 // pred_fallthru
          _
        // Predicated region
        $region17: #{fffc_forward.1} parent=11 // pred_check
          %p211 = pneg %p83
        $region18: #{fffc_forward.1} parent=11 // pred_check_branch
          %213 = sbr.rel (%p211) target = $region20
        $region19: #{fffc_forward.1} parent=11 // pred_region
          _
        $region20: #{fffc_forward.1} parent=11 // pred_fallthru
          _
        // Predicated region
        $region21: #{fffc_forward.1} parent=11 // pred_check
          %p214 = pneg %p104
        $region22: #{fffc_forward.1} parent=11 // pred_check_branch
          %216 = sbr.rel (%p214) target = $region24
        $region23: #{fffc_forward.1} parent=11 // pred_region
          %218 = vsyncadd [#allocation3], 0
          %s219 = sshll.u32 %s3, 4
          %s220 = int_to_ptr.hbm [resolvable:$true] %s219
          %s221 = sshll.u32 [#allocation2], 4
          %s222 = int_to_ptr.vmem [resolvable:$true] %s221
          %227 = dma.hbm_to_vmem [thread:$0]  %s220, 8192, %s222, [#allocation3], 128, 128, 8
        $region24: #{fffc_forward.1} parent=11 // pred_fallthru
          _
        // Predicated region
        $region25: #{fffc_forward.1} parent=11 // pred_check
          %p228 = pneg %p125
        $region26: #{fffc_forward.1} parent=11 // pred_check_branch
          %230 = sbr.rel (%p228) target = $region28
        $region27: #{fffc_forward.1} parent=11 // pred_region
          _
        $region28: #{fffc_forward.1} parent=11 // pred_fallthru
          _
        // Predicated region
        $region29: #{fffc_forward.1} parent=11 // pred_check
          %p231 = pneg %p146
        $region30: #{fffc_forward.1} parent=11 // pred_check_branch
          %233 = sbr.rel (%p231) target = $region32
        $region31: #{fffc_forward.1} parent=11 // pred_region
          %235 = vsyncadd [#allocation5], 0
          %s236 = sshll.u32 %s5, 4
          %s237 = int_to_ptr.hbm [resolvable:$true] %s236
          %s238 = sshll.u32 [#allocation4], 4
          %s239 = int_to_ptr.vmem [resolvable:$true] %s238
          %244 = dma.hbm_to_vmem [thread:$0]  %s237, 2048, %s239, [#allocation5], 64, 64, 4
        $region32: #{fffc_forward.1} parent=11 // pred_fallthru
          _
        // Predicated region
        $region33: #{fffc_forward.1} parent=11 // pred_check
          %p245 = pneg %p167
        $region34: #{fffc_forward.1} parent=11 // pred_check_branch
          %247 = sbr.rel (%p245) target = $region36
        $region35: #{fffc_forward.1} parent=11 // pred_region
          _
        $region36: #{fffc_forward.1} parent=11 // pred_fallthru
          _
      $region12: #{fffc_forward.1} parent=5 // pred_fallthru
        _
      %p248 = scmp.lt.s32.totalorder %s15, 2
      // Predicated region
      $region37: #{fffc_forward.1} parent=5 // pred_check
        %p249 = pneg %p248
      $region38: #{fffc_forward.1} parent=5 // pred_check_branch
        %251 = sbr.rel (%p249) target = $region40
      $region39: #{fffc_forward.1} parent=5 // pred_region
        // Predicated region
        $region41: #{fffc_forward.1} parent=39 // pred_check
          %p252 = pneg %p35
        $region42: #{fffc_forward.1} parent=39 // pred_check_branch
          %254 = sbr.rel (%p252) target = $region44
        $region43: #{fffc_forward.1} parent=39 // pred_region
          %s255 = smul.u32 16, %s15
          %p256 = scmp.lt.s32.totalorder %s255, 31
          %s257 = scalar_select %p256, %s255, 31
          %s258 = smul.addr %s257, 2
          %s259 = smul.addr %s258, 8
          %s260 = scalar_lea.vmem %s0, %s259
          %s261 = smul.u32 16, %s15
        $region44: #{fffc_forward.1} parent=39 // pred_fallthru
          _
      $region40: #{fffc_forward.1} parent=5 // pred_fallthru
        _
      %p262 = scmp.le.s32.totalorder 1, %s15
      %p263 = scmp.lt.s32.totalorder %s15, 3
      %p264 = pnand %p262, %p263
      %p265 = pneg %p264
      // Predicated region
      $region45: #{fffc_forward.1} parent=5 // pred_check
        _
      $region46: #{fffc_forward.1} parent=5 // pred_check_branch
        %267 = sbr.rel (%p264) target = $region48
      $region47: #{fffc_forward.1} parent=5 // pred_region
        %s268 = ssub.s32 %s15, 1
        // Predicated region
        $region49: #{fffc_forward.1} parent=47 // pred_check
          %p269 = pneg %p104
        $region50: #{fffc_forward.1} parent=47 // pred_check_branch
          %271 = sbr.rel (%p269) target = $region52
        $region51: #{fffc_forward.1} parent=47 // pred_region
          %273 = dma.done [#allocation3], 8192
        $region52: #{fffc_forward.1} parent=47 // pred_fallthru
          _
        // Predicated region
        $region53: #{fffc_forward.1} parent=47 // pred_check
          %p274 = pneg %p146
        $region54: #{fffc_forward.1} parent=47 // pred_check_branch
          %276 = sbr.rel (%p274) target = $region56
        $region55: #{fffc_forward.1} parent=47 // pred_region
          %278 = dma.done [#allocation5], 2048
        $region56: #{fffc_forward.1} parent=47 // pred_fallthru
          _
        %s279 = smul.u32 16, %s20
        %p280 = scmp.lt.s32.totalorder %s279, 31
        %s281 = scalar_select %p280, %s279, 31
        %s282 = smul.addr %s281, 2
        %s283 = smul.addr %s282, 8
        %s284 = scalar_lea.vmem %s0, %s283
        %p285 = pneg %p41
        %p286 = pneg %p38
        %p287 = pneg %p62
        %p288 = pneg %p59
        %p289 = pneg %p83
        %p290 = pneg %p80
        %p291 = pneg %p104
        %p292 = pneg %p101
        %p293 = pneg %p125
        %p294 = pneg %p122
        %p295 = pneg %p146
        %p296 = pneg %p143
        %p297 = pneg %p167
        %p298 = pneg %p164
        %p299 = pneg %p193
        %p300 = pneg %p190
        %s301 = smul.u32 16, %s20
        %p302 = scmp.lt.s32.totalorder %s301, 31
        %s303 = scalar_select %p302, %s301, 31
        %s304 = smul.addr %s303, 4
        %s305 = scalar_lea.vmem %s7, %s304
        %s306 = smul.u32 16, %s20
        %p307 = scmp.lt.s32.totalorder %s306, 31
        %s308 = scalar_select %p307, %s306, 31
        %s309 = smul.addr %s308, 2
        %s310 = smul.addr %s309, 8
        %s311 = scalar_lea.vmem %s0, %s310
        %s312 = smul.u32 16, %s20
        %s313 = smul.u32 16, %s20
        %p314 = scmp.lt.s32.totalorder %s313, 31
        %s315 = scalar_select %p314, %s313, 31
        %s316 = smul.addr %s315, 4
        %s317 = scalar_lea.vmem %s7, %s316
        %s318 = smul.u32 16, %s20
        %v319 = vld [vmem:[%s311] sm:$0xff]
        %v320 = vld [vmem:[%s311 + $0x8] sm:$0xff]
        %v321 = vld [vmem:[%s311 + $0x10] sm:$0xff]
        %v322 = vld [vmem:[%s311 + $0x18] sm:$0xff]
        %v323 = vld [vmem:[%s311 + $0x20] sm:$0xff]
        %v324 = vld [vmem:[%s311 + $0x28] sm:$0xff]
        %v325 = vld [vmem:[%s311 + $0x30] sm:$0xff]
        %v326 = vld [vmem:[%s311 + $0x38] sm:$0xff]
        %v327 = vld [vmem:[%s311 + $0x40] sm:$0xff]
        %v328 = vld [vmem:[%s311 + $0x48] sm:$0xff]
        %v329 = vld [vmem:[%s311 + $0x50] sm:$0xff]
        %v330 = vld [vmem:[%s311 + $0x58] sm:$0xff]
        %v331 = vld [vmem:[%s311 + $0x60] sm:$0xff]
        %v332 = vld [vmem:[%s311 + $0x68] sm:$0xff]
        %v333 = vld [vmem:[%s311 + $0x70] sm:$0xff]
        %v334 = vld [vmem:[%s311 + $0x78] sm:$0xff]
        %v335 = vld [vmem:[%s311 + $0x80] sm:$0xff]
        %v336 = vld [vmem:[%s311 + $0x88] sm:$0xff]
        %v337 = vld [vmem:[%s311 + $0x90] sm:$0xff]
        %v338 = vld [vmem:[%s311 + $0x98] sm:$0xff]
        %v339 = vld [vmem:[%s311 + $0xa0] sm:$0xff]
        %v340 = vld [vmem:[%s311 + $0xa8] sm:$0xff]
        %v341 = vld [vmem:[%s311 + $0xb0] sm:$0xff]
        %v342 = vld [vmem:[%s311 + $0xb8] sm:$0xff]
        %v343 = vld [vmem:[%s311 + $0xc0] sm:$0xff]
        %v344 = vld [vmem:[%s311 + $0xc8] sm:$0xff]
        %v345 = vld [vmem:[%s311 + $0xd0] sm:$0xff]
        %v346 = vld [vmem:[%s311 + $0xd8] sm:$0xff]
        %v347 = vld [vmem:[%s311 + $0xe0] sm:$0xff]
        %v348 = vld [vmem:[%s311 + $0xe8] sm:$0xff]
        %v349 = vld [vmem:[%s311 + $0xf0] sm:$0xff]
        %v350 = vld [vmem:[%s311 + $0xf8] sm:$0xff]
        %v351 = vpack.c.bf16 %v321, %v319
        %v352 = vpack.c.bf16 %v322, %v320
        %v353 = vpack.c.bf16 %v325, %v323
        %v354 = vpack.c.bf16 %v326, %v324
        %v355 = vpack.c.bf16 %v329, %v327
        %v356 = vpack.c.bf16 %v330, %v328
        %v357 = vpack.c.bf16 %v333, %v331
        %v358 = vpack.c.bf16 %v334, %v332
        %v359 = vpack.c.bf16 %v337, %v335
        %v360 = vpack.c.bf16 %v338, %v336
        %v361 = vpack.c.bf16 %v341, %v339
        %v362 = vpack.c.bf16 %v342, %v340
        %v363 = vpack.c.bf16 %v345, %v343
        %v364 = vpack.c.bf16 %v346, %v344
        %v365 = vpack.c.bf16 %v349, %v347
        %v366 = vpack.c.bf16 %v350, %v348
        %v367 = vld [vmem:[%s1] sm:$0xff]
        %v368 = vld [vmem:[%s1 + $0x8] sm:$0xff]
        %v369 = vld [vmem:[%s1 + $0x10] sm:$0xff]
        %v370 = vld [vmem:[%s1 + $0x18] sm:$0xff]
        %v371 = vld [vmem:[%s1 + $0x20] sm:$0xff]
        %v372 = vld [vmem:[%s1 + $0x28] sm:$0xff]
        %v373 = vld [vmem:[%s1 + $0x30] sm:$0xff]
        %v374 = vld [vmem:[%s1 + $0x38] sm:$0xff]
        %v375 = vld [vmem:[%s1 + $0x40] sm:$0xff]
        %v376 = vld [vmem:[%s1 + $0x48] sm:$0xff]
        %v377 = vld [vmem:[%s1 + $0x50] sm:$0xff]
        %v378 = vld [vmem:[%s1 + $0x58] sm:$0xff]
        %v379 = vld [vmem:[%s1 + $0x60] sm:$0xff]
        %v380 = vld [vmem:[%s1 + $0x68] sm:$0xff]
        %v381 = vld [vmem:[%s1 + $0x70] sm:$0xff]
        %v382 = vld [vmem:[%s1 + $0x78] sm:$0xff]
        %v383 = vld [vmem:[%s1 + $0x80] sm:$0xff]
        %v384 = vld [vmem:[%s1 + $0x88] sm:$0xff]
        %v385 = vld [vmem:[%s1 + $0x90] sm:$0xff]
        %v386 = vld [vmem:[%s1 + $0x98] sm:$0xff]
        %v387 = vld [vmem:[%s1 + $0xa0] sm:$0xff]
        %v388 = vld [vmem:[%s1 + $0xa8] sm:$0xff]
        %v389 = vld [vmem:[%s1 + $0xb0] sm:$0xff]
        %v390 = vld [vmem:[%s1 + $0xb8] sm:$0xff]
        %v391 = vld [vmem:[%s1 + $0xc0] sm:$0xff]
        %v392 = vld [vmem:[%s1 + $0xc8] sm:$0xff]
        %v393 = vld [vmem:[%s1 + $0xd0] sm:$0xff]
        %v394 = vld [vmem:[%s1 + $0xd8] sm:$0xff]
        %v395 = vld [vmem:[%s1 + $0xe0] sm:$0xff]
        %v396 = vld [vmem:[%s1 + $0xe8] sm:$0xff]
        %v397 = vld [vmem:[%s1 + $0xf0] sm:$0xff]
        %v398 = vld [vmem:[%s1 + $0xf8] sm:$0xff]
        %v399 = vld [vmem:[%s1 + $0x100] sm:$0xff]
        %v400 = vld [vmem:[%s1 + $0x108] sm:$0xff]
        %v401 = vld [vmem:[%s1 + $0x110] sm:$0xff]
        %v402 = vld [vmem:[%s1 + $0x118] sm:$0xff]
        %v403 = vld [vmem:[%s1 + $0x120] sm:$0xff]
        %v404 = vld [vmem:[%s1 + $0x128] sm:$0xff]
        %v405 = vld [vmem:[%s1 + $0x130] sm:$0xff]
        %v406 = vld [vmem:[%s1 + $0x138] sm:$0xff]
        %v407 = vld [vmem:[%s1 + $0x140] sm:$0xff]
        %v408 = vld [vmem:[%s1 + $0x148] sm:$0xff]
        %v409 = vld [vmem:[%s1 + $0x150] sm:$0xff]
        %v410 = vld [vmem:[%s1 + $0x158] sm:$0xff]
        %v411 = vld [vmem:[%s1 + $0x160] sm:$0xff]
        %v412 = vld [vmem:[%s1 + $0x168] sm:$0xff]
        %v413 = vld [vmem:[%s1 + $0x170] sm:$0xff]
        %v414 = vld [vmem:[%s1 + $0x178] sm:$0xff]
        %v415 = vld [vmem:[%s1 + $0x180] sm:$0xff]
        %v416 = vld [vmem:[%s1 + $0x188] sm:$0xff]
        %v417 = vld [vmem:[%s1 + $0x190] sm:$0xff]
        %v418 = vld [vmem:[%s1 + $0x198] sm:$0xff]
        %v419 = vld [vmem:[%s1 + $0x1a0] sm:$0xff]
        %v420 = vld [vmem:[%s1 + $0x1a8] sm:$0xff]
        %v421 = vld [vmem:[%s1 + $0x1b0] sm:$0xff]
        %v422 = vld [vmem:[%s1 + $0x1b8] sm:$0xff]
        %v423 = vld [vmem:[%s1 + $0x1c0] sm:$0xff]
        %v424 = vld [vmem:[%s1 + $0x1c8] sm:$0xff]
        %v425 = vld [vmem:[%s1 + $0x1d0] sm:$0xff]
        %v426 = vld [vmem:[%s1 + $0x1d8] sm:$0xff]
        %v427 = vld [vmem:[%s1 + $0x1e0] sm:$0xff]
        %v428 = vld [vmem:[%s1 + $0x1e8] sm:$0xff]
        %v429 = vld [vmem:[%s1 + $0x1f0] sm:$0xff]
        %v430 = vld [vmem:[%s1 + $0x1f8] sm:$0xff]
        %v431 = vld [vmem:[%s2] sm:$0xf]
        %v433 = vperm.slane %v431, 0
        %v434 = vperm.slane %v431, 1
        %v435 = vperm.slane %v431, 2
        %v436 = vperm.slane %v431, 3
        %v505 = vunpack.c.l.b16 %v367
        %v506 = vunpack.c.h.b16 %v367
        %v507 = vunpack.c.l.b16 %v368
        %v508 = vunpack.c.h.b16 %v368
        %v509 = vunpack.c.l.b16 %v369
        %v510 = vunpack.c.h.b16 %v369
        %v511 = vunpack.c.l.b16 %v370
        %v512 = vunpack.c.h.b16 %v370
        %v513 = vunpack.c.l.b16 %v371
        %v514 = vunpack.c.h.b16 %v371
        %v515 = vunpack.c.l.b16 %v372
        %v516 = vunpack.c.h.b16 %v372
        %v517 = vunpack.c.l.b16 %v373
        %v518 = vunpack.c.h.b16 %v373
        %v519 = vunpack.c.l.b16 %v374
        %v520 = vunpack.c.h.b16 %v374
        %v521 = vunpack.c.l.b16 %v375
        %v522 = vunpack.c.h.b16 %v375
        %v523 = vunpack.c.l.b16 %v376
        %v524 = vunpack.c.h.b16 %v376
        %v525 = vunpack.c.l.b16 %v377
        %v526 = vunpack.c.h.b16 %v377
        %v527 = vunpack.c.l.b16 %v378
        %v528 = vunpack.c.h.b16 %v378
        %v529 = vunpack.c.l.b16 %v379
        %v530 = vunpack.c.h.b16 %v379
        %v531 = vunpack.c.l.b16 %v380
        %v532 = vunpack.c.h.b16 %v380
        %v533 = vunpack.c.l.b16 %v381
        %v534 = vunpack.c.h.b16 %v381
        %v535 = vunpack.c.l.b16 %v382
        %v536 = vunpack.c.h.b16 %v382
        %v537 = vunpack.c.l.b16 %v383
        %v538 = vunpack.c.h.b16 %v383
        %v539 = vunpack.c.l.b16 %v384
        %v540 = vunpack.c.h.b16 %v384
        %v541 = vunpack.c.l.b16 %v385
        %v542 = vunpack.c.h.b16 %v385
        %v543 = vunpack.c.l.b16 %v386
        %v544 = vunpack.c.h.b16 %v386
        %v545 = vunpack.c.l.b16 %v387
        %v546 = vunpack.c.h.b16 %v387
        %v547 = vunpack.c.l.b16 %v388
        %v548 = vunpack.c.h.b16 %v388
        %v549 = vunpack.c.l.b16 %v389
        %v550 = vunpack.c.h.b16 %v389
        %v551 = vunpack.c.l.b16 %v390
        %v552 = vunpack.c.h.b16 %v390
        %v553 = vunpack.c.l.b16 %v391
        %v554 = vunpack.c.h.b16 %v391
        %v555 = vunpack.c.l.b16 %v392
        %v556 = vunpack.c.h.b16 %v392
        %v557 = vunpack.c.l.b16 %v393
        %v558 = vunpack.c.h.b16 %v393
        %v559 = vunpack.c.l.b16 %v394
        %v560 = vunpack.c.h.b16 %v394
        %v561 = vunpack.c.l.b16 %v395
        %v562 = vunpack.c.h.b16 %v395
        %v563 = vunpack.c.l.b16 %v396
        %v564 = vunpack.c.h.b16 %v396
        %v565 = vunpack.c.l.b16 %v397
        %v566 = vunpack.c.h.b16 %v397
        %v567 = vunpack.c.l.b16 %v398
        %v568 = vunpack.c.h.b16 %v398
        %v569 = vunpack.c.l.b16 %v399
        %v570 = vunpack.c.h.b16 %v399
        %v571 = vunpack.c.l.b16 %v400
        %v572 = vunpack.c.h.b16 %v400
        %v573 = vunpack.c.l.b16 %v401
        %v574 = vunpack.c.h.b16 %v401
        %v575 = vunpack.c.l.b16 %v402
        %v576 = vunpack.c.h.b16 %v402
        %v577 = vunpack.c.l.b16 %v403
        %v578 = vunpack.c.h.b16 %v403
        %v579 = vunpack.c.l.b16 %v404
        %v580 = vunpack.c.h.b16 %v404
        %v581 = vunpack.c.l.b16 %v405
        %v582 = vunpack.c.h.b16 %v405
        %v583 = vunpack.c.l.b16 %v406
        %v584 = vunpack.c.h.b16 %v406
        %v585 = vunpack.c.l.b16 %v407
        %v586 = vunpack.c.h.b16 %v407
        %v587 = vunpack.c.l.b16 %v408
        %v588 = vunpack.c.h.b16 %v408
        %v589 = vunpack.c.l.b16 %v409
        %v590 = vunpack.c.h.b16 %v409
        %v591 = vunpack.c.l.b16 %v410
        %v592 = vunpack.c.h.b16 %v410
        %v593 = vunpack.c.l.b16 %v411
        %v594 = vunpack.c.h.b16 %v411
        %v595 = vunpack.c.l.b16 %v412
        %v596 = vunpack.c.h.b16 %v412
        %v597 = vunpack.c.l.b16 %v413
        %v598 = vunpack.c.h.b16 %v413
        %v599 = vunpack.c.l.b16 %v414
        %v600 = vunpack.c.h.b16 %v414
        %v601 = vunpack.c.l.b16 %v415
        %v602 = vunpack.c.h.b16 %v415
        %v603 = vunpack.c.l.b16 %v416
        %v604 = vunpack.c.h.b16 %v416
        %v605 = vunpack.c.l.b16 %v417
        %v606 = vunpack.c.h.b16 %v417
        %v607 = vunpack.c.l.b16 %v418
        %v608 = vunpack.c.h.b16 %v418
        %v609 = vunpack.c.l.b16 %v419
        %v610 = vunpack.c.h.b16 %v419
        %v611 = vunpack.c.l.b16 %v420
        %v612 = vunpack.c.h.b16 %v420
        %v613 = vunpack.c.l.b16 %v421
        %v614 = vunpack.c.h.b16 %v421
        %v615 = vunpack.c.l.b16 %v422
        %v616 = vunpack.c.h.b16 %v422
        %v617 = vunpack.c.l.b16 %v423
        %v618 = vunpack.c.h.b16 %v423
        %v619 = vunpack.c.l.b16 %v424
        %v620 = vunpack.c.h.b16 %v424
        %v621 = vunpack.c.l.b16 %v425
        %v622 = vunpack.c.h.b16 %v425
        %v623 = vunpack.c.l.b16 %v426
        %v624 = vunpack.c.h.b16 %v426
        %v625 = vunpack.c.l.b16 %v427
        %v626 = vunpack.c.h.b16 %v427
        %v627 = vunpack.c.l.b16 %v428
        %v628 = vunpack.c.h.b16 %v428
        %v629 = vunpack.c.l.b16 %v429
        %v630 = vunpack.c.h.b16 %v429
        %v631 = vunpack.c.l.b16 %v430
        %v632 = vunpack.c.h.b16 %v430
        %v633 = vpack.c.b16 %v509, %v505
        %v634 = vpack.c.b16 %v510, %v506
        %v635 = vpack.c.b16 %v511, %v507
        %v636 = vpack.c.b16 %v512, %v508
        %v637 = vpack.c.b16 %v517, %v513
        %v638 = vpack.c.b16 %v518, %v514
        %v639 = vpack.c.b16 %v519, %v515
        %v640 = vpack.c.b16 %v520, %v516
        %v641 = vpack.c.b16 %v525, %v521
        %v642 = vpack.c.b16 %v526, %v522
        %v643 = vpack.c.b16 %v527, %v523
        %v644 = vpack.c.b16 %v528, %v524
        %v645 = vpack.c.b16 %v533, %v529
        %v646 = vpack.c.b16 %v534, %v530
        %v647 = vpack.c.b16 %v535, %v531
        %v648 = vpack.c.b16 %v536, %v532
        %v649 = vpack.c.b16 %v541, %v537
        %v650 = vpack.c.b16 %v542, %v538
        %v651 = vpack.c.b16 %v543, %v539
        %v652 = vpack.c.b16 %v544, %v540
        %v653 = vpack.c.b16 %v549, %v545
        %v654 = vpack.c.b16 %v550, %v546
        %v655 = vpack.c.b16 %v551, %v547
        %v656 = vpack.c.b16 %v552, %v548
        %v657 = vpack.c.b16 %v557, %v553
        %v658 = vpack.c.b16 %v558, %v554
        %v659 = vpack.c.b16 %v559, %v555
        %v660 = vpack.c.b16 %v560, %v556
        %v661 = vpack.c.b16 %v565, %v561
        %v662 = vpack.c.b16 %v566, %v562
        %v663 = vpack.c.b16 %v567, %v563
        %v664 = vpack.c.b16 %v568, %v564
        %v665 = vpack.c.b16 %v573, %v569
        %v666 = vpack.c.b16 %v574, %v570
        %v667 = vpack.c.b16 %v575, %v571
        %v668 = vpack.c.b16 %v576, %v572
        %v669 = vpack.c.b16 %v581, %v577
        %v670 = vpack.c.b16 %v582, %v578
        %v671 = vpack.c.b16 %v583, %v579
        %v672 = vpack.c.b16 %v584, %v580
        %v673 = vpack.c.b16 %v589, %v585
        %v674 = vpack.c.b16 %v590, %v586
        %v675 = vpack.c.b16 %v591, %v587
        %v676 = vpack.c.b16 %v592, %v588
        %v677 = vpack.c.b16 %v597, %v593
        %v678 = vpack.c.b16 %v598, %v594
        %v679 = vpack.c.b16 %v599, %v595
        %v680 = vpack.c.b16 %v600, %v596
        %v681 = vpack.c.b16 %v605, %v601
        %v682 = vpack.c.b16 %v606, %v602
        %v683 = vpack.c.b16 %v607, %v603
        %v684 = vpack.c.b16 %v608, %v604
        %v685 = vpack.c.b16 %v613, %v609
        %v686 = vpack.c.b16 %v614, %v610
        %v687 = vpack.c.b16 %v615, %v611
        %v688 = vpack.c.b16 %v616, %v612
        %v689 = vpack.c.b16 %v621, %v617
        %v690 = vpack.c.b16 %v622, %v618
        %v691 = vpack.c.b16 %v623, %v619
        %v692 = vpack.c.b16 %v624, %v620
        %v693 = vpack.c.b16 %v629, %v625
        %v694 = vpack.c.b16 %v630, %v626
        %v695 = vpack.c.b16 %v631, %v627
        %v696 = vpack.c.b16 %v632, %v628
        %761 = vmatpush.bf16.msra.mxu0 %v661
        %762 = vmatpush.bf16.msra.mxu0 %v657
        %763 = vmatpush.bf16.msra.mxu0 %v653
        %764 = vmatpush.bf16.msra.mxu0 %v649
        %765 = vmatpush.bf16.msra.mxu0 %v645
        %766 = vmatpush.bf16.msra.mxu0 %v641
        %767 = vmatpush.bf16.msra.mxu0 %v637
        %768 = vmatpush.bf16.msra.mxu0 %v633
        %769 = vmatmul.bf16.gmra.mxu0 %v351
        %v770 = vpop.f32.mrf.mxu0
        %v771 = vadd.f32 %v433, %v770
        %v772 = vpop.f32.mrf.mxu0
        %v773 = vadd.f32 %v433, %v772
        %774 = vmatmul.bf16.gmra.mxu0 %v353
        %v775 = vpop.f32.mrf.mxu0
        %v776 = vadd.f32 %v433, %v775
        %v777 = vpop.f32.mrf.mxu0
        %v778 = vadd.f32 %v433, %v777
        %779 = vmatmul.bf16.gmra.mxu0 %v355
        %v780 = vpop.f32.mrf.mxu0
        %v781 = vadd.f32 %v433, %v780
        %v782 = vpop.f32.mrf.mxu0
        %v783 = vadd.f32 %v433, %v782
        %784 = vmatmul.bf16.gmra.mxu0 %v357
        %v785 = vpop.f32.mrf.mxu0
        %v786 = vadd.f32 %v433, %v785
        %v787 = vpop.f32.mrf.mxu0
        %v788 = vadd.f32 %v433, %v787
        %789 = vmatmul.bf16.gmra.mxu0 %v359
        %v790 = vpop.f32.mrf.mxu0
        %v791 = vadd.f32 %v433, %v790
        %v792 = vpop.f32.mrf.mxu0
        %v793 = vadd.f32 %v433, %v792
        %794 = vmatmul.bf16.gmra.mxu0 %v361
        %v795 = vpop.f32.mrf.mxu0
        %v796 = vadd.f32 %v433, %v795
        %v797 = vpop.f32.mrf.mxu0
        %v798 = vadd.f32 %v433, %v797
        %799 = vmatmul.bf16.gmra.mxu0 %v363
        %v800 = vpop.f32.mrf.mxu0
        %v801 = vadd.f32 %v433, %v800
        %v802 = vpop.f32.mrf.mxu0
        %v803 = vadd.f32 %v433, %v802
        %804 = vmatmul.bf16.gmra.mxu0 %v365
        %v805 = vpop.f32.mrf.mxu0
        %v806 = vadd.f32 %v433, %v805
        %v807 = vpop.f32.mrf.mxu0
        %v808 = vadd.f32 %v433, %v807
        %809 = vdwg.mxu0
        %810 = vmatpush.bf16.msra.mxu0 %v693
        %811 = vmatpush.bf16.msra.mxu0 %v689
        %812 = vmatpush.bf16.msra.mxu0 %v685
        %813 = vmatpush.bf16.msra.mxu0 %v681
        %814 = vmatpush.bf16.msra.mxu0 %v677
        %815 = vmatpush.bf16.msra.mxu0 %v673
        %816 = vmatpush.bf16.msra.mxu0 %v669
        %817 = vmatpush.bf16.msra.mxu0 %v665
        %818 = vmatmul.bf16.gmra.mxu0 %v352
        %v819 = vpop.f32.mrf.mxu0
        %v820 = vadd.f32 %v771, %v819
        %v821 = vpop.f32.mrf.mxu0
        %v822 = vadd.f32 %v773, %v821
        %823 = vmatmul.bf16.gmra.mxu0 %v354
        %v824 = vpop.f32.mrf.mxu0
        %v825 = vadd.f32 %v776, %v824
        %v826 = vpop.f32.mrf.mxu0
        %v827 = vadd.f32 %v778, %v826
        %828 = vmatmul.bf16.gmra.mxu0 %v356
        %v829 = vpop.f32.mrf.mxu0
        %v830 = vadd.f32 %v781, %v829
        %v831 = vpop.f32.mrf.mxu0
        %v832 = vadd.f32 %v783, %v831
        %833 = vmatmul.bf16.gmra.mxu0 %v358
        %v834 = vpop.f32.mrf.mxu0
        %v835 = vadd.f32 %v786, %v834
        %v836 = vpop.f32.mrf.mxu0
        %v837 = vadd.f32 %v788, %v836
        %838 = vmatmul.bf16.gmra.mxu0 %v360
        %v839 = vpop.f32.mrf.mxu0
        %v840 = vadd.f32 %v791, %v839
        %v841 = vpop.f32.mrf.mxu0
        %v842 = vadd.f32 %v793, %v841
        %843 = vmatmul.bf16.gmra.mxu0 %v362
        %v844 = vpop.f32.mrf.mxu0
        %v845 = vadd.f32 %v796, %v844
        %v846 = vpop.f32.mrf.mxu0
        %v847 = vadd.f32 %v798, %v846
        %848 = vmatmul.bf16.gmra.mxu0 %v364
        %v849 = vpop.f32.mrf.mxu0
        %v850 = vadd.f32 %v801, %v849
        %v851 = vpop.f32.mrf.mxu0
        %v852 = vadd.f32 %v803, %v851
        %853 = vmatmul.bf16.gmra.mxu0 %v366
        %v854 = vpop.f32.mrf.mxu0
        %v855 = vadd.f32 %v806, %v854
        %v856 = vpop.f32.mrf.mxu0
        %v857 = vadd.f32 %v808, %v856
        %858 = vdwg.mxu0
        %859 = vmatpush.bf16.msra.mxu0 %v662
        %860 = vmatpush.bf16.msra.mxu0 %v658
        %861 = vmatpush.bf16.msra.mxu0 %v654
        %862 = vmatpush.bf16.msra.mxu0 %v650
        %863 = vmatpush.bf16.msra.mxu0 %v646
        %864 = vmatpush.bf16.msra.mxu0 %v642
        %865 = vmatpush.bf16.msra.mxu0 %v638
        %866 = vmatpush.bf16.msra.mxu0 %v634
        %867 = vmatmul.bf16.gmra.mxu0 %v351
        %v868 = vpop.f32.mrf.mxu0
        %v869 = vadd.f32 %v434, %v868
        %v870 = vpop.f32.mrf.mxu0
        %v871 = vadd.f32 %v434, %v870
        %872 = vmatmul.bf16.gmra.mxu0 %v353
        %v873 = vpop.f32.mrf.mxu0
        %v874 = vadd.f32 %v434, %v873
        %v875 = vpop.f32.mrf.mxu0
        %v876 = vadd.f32 %v434, %v875
        %877 = vmatmul.bf16.gmra.mxu0 %v355
        %v878 = vpop.f32.mrf.mxu0
        %v879 = vadd.f32 %v434, %v878
        %v880 = vpop.f32.mrf.mxu0
        %v881 = vadd.f32 %v434, %v880
        %882 = vmatmul.bf16.gmra.mxu0 %v357
        %v883 = vpop.f32.mrf.mxu0
        %v884 = vadd.f32 %v434, %v883
        %v885 = vpop.f32.mrf.mxu0
        %v886 = vadd.f32 %v434, %v885
        %887 = vmatmul.bf16.gmra.mxu0 %v359
        %v888 = vpop.f32.mrf.mxu0
        %v889 = vadd.f32 %v434, %v888
        %v890 = vpop.f32.mrf.mxu0
        %v891 = vadd.f32 %v434, %v890
        %892 = vmatmul.bf16.gmra.mxu0 %v361
        %v893 = vpop.f32.mrf.mxu0
        %v894 = vadd.f32 %v434, %v893
        %v895 = vpop.f32.mrf.mxu0
        %v896 = vadd.f32 %v434, %v895
        %897 = vmatmul.bf16.gmra.mxu0 %v363
        %v898 = vpop.f32.mrf.mxu0
        %v899 = vadd.f32 %v434, %v898
        %v900 = vpop.f32.mrf.mxu0
        %v901 = vadd.f32 %v434, %v900
        %902 = vmatmul.bf16.gmra.mxu0 %v365
        %v903 = vpop.f32.mrf.mxu0
        %v904 = vadd.f32 %v434, %v903
        %v905 = vpop.f32.mrf.mxu0
        %v906 = vadd.f32 %v434, %v905
        %907 = vdwg.mxu0
        %908 = vmatpush.bf16.msra.mxu0 %v694
        %909 = vmatpush.bf16.msra.mxu0 %v690
        %910 = vmatpush.bf16.msra.mxu0 %v686
        %911 = vmatpush.bf16.msra.mxu0 %v682
        %912 = vmatpush.bf16.msra.mxu0 %v678
        %913 = vmatpush.bf16.msra.mxu0 %v674
        %914 = vmatpush.bf16.msra.mxu0 %v670
        %915 = vmatpush.bf16.msra.mxu0 %v666
        %916 = vmatmul.bf16.gmra.mxu0 %v352
        %v917 = vpop.f32.mrf.mxu0
        %v918 = vadd.f32 %v869, %v917
        %v919 = vpop.f32.mrf.mxu0
        %v920 = vadd.f32 %v871, %v919
        %921 = vmatmul.bf16.gmra.mxu0 %v354
        %v922 = vpop.f32.mrf.mxu0
        %v923 = vadd.f32 %v874, %v922
        %v924 = vpop.f32.mrf.mxu0
        %v925 = vadd.f32 %v876, %v924
        %926 = vmatmul.bf16.gmra.mxu0 %v356
        %v927 = vpop.f32.mrf.mxu0
        %v928 = vadd.f32 %v879, %v927
        %v929 = vpop.f32.mrf.mxu0
        %v930 = vadd.f32 %v881, %v929
        %931 = vmatmul.bf16.gmra.mxu0 %v358
        %v932 = vpop.f32.mrf.mxu0
        %v933 = vadd.f32 %v884, %v932
        %v934 = vpop.f32.mrf.mxu0
        %v935 = vadd.f32 %v886, %v934
        %936 = vmatmul.bf16.gmra.mxu0 %v360
        %v937 = vpop.f32.mrf.mxu0
        %v938 = vadd.f32 %v889, %v937
        %v939 = vpop.f32.mrf.mxu0
        %v940 = vadd.f32 %v891, %v939
        %941 = vmatmul.bf16.gmra.mxu0 %v362
        %v942 = vpop.f32.mrf.mxu0
        %v943 = vadd.f32 %v894, %v942
        %v944 = vpop.f32.mrf.mxu0
        %v945 = vadd.f32 %v896, %v944
        %946 = vmatmul.bf16.gmra.mxu0 %v364
        %v947 = vpop.f32.mrf.mxu0
        %v948 = vadd.f32 %v899, %v947
        %v949 = vpop.f32.mrf.mxu0
        %v950 = vadd.f32 %v901, %v949
        %951 = vmatmul.bf16.gmra.mxu0 %v366
        %v952 = vpop.f32.mrf.mxu0
        %v953 = vadd.f32 %v904, %v952
        %v954 = vpop.f32.mrf.mxu0
        %v955 = vadd.f32 %v906, %v954
        %956 = vdwg.mxu0
        %957 = vmatpush.bf16.msra.mxu0 %v663
        %958 = vmatpush.bf16.msra.mxu0 %v659
        %959 = vmatpush.bf16.msra.mxu0 %v655
        %960 = vmatpush.bf16.msra.mxu0 %v651
        %961 = vmatpush.bf16.msra.mxu0 %v647
        %962 = vmatpush.bf16.msra.mxu0 %v643
        %963 = vmatpush.bf16.msra.mxu0 %v639
        %964 = vmatpush.bf16.msra.mxu0 %v635
        %965 = vmatmul.bf16.gmra.mxu0 %v351
        %v966 = vpop.f32.mrf.mxu0
        %v967 = vadd.f32 %v435, %v966
        %v968 = vpop.f32.mrf.mxu0
        %v969 = vadd.f32 %v435, %v968
        %970 = vmatmul.bf16.gmra.mxu0 %v353
        %v971 = vpop.f32.mrf.mxu0
        %v972 = vadd.f32 %v435, %v971
        %v973 = vpop.f32.mrf.mxu0
        %v974 = vadd.f32 %v435, %v973
        %975 = vmatmul.bf16.gmra.mxu0 %v355
        %v976 = vpop.f32.mrf.mxu0
        %v977 = vadd.f32 %v435, %v976
        %v978 = vpop.f32.mrf.mxu0
        %v979 = vadd.f32 %v435, %v978
        %980 = vmatmul.bf16.gmra.mxu0 %v357
        %v981 = vpop.f32.mrf.mxu0
        %v982 = vadd.f32 %v435, %v981
        %v983 = vpop.f32.mrf.mxu0
        %v984 = vadd.f32 %v435, %v983
        %985 = vmatmul.bf16.gmra.mxu0 %v359
        %v986 = vpop.f32.mrf.mxu0
        %v987 = vadd.f32 %v435, %v986
        %v988 = vpop.f32.mrf.mxu0
        %v989 = vadd.f32 %v435, %v988
        %990 = vmatmul.bf16.gmra.mxu0 %v361
        %v991 = vpop.f32.mrf.mxu0
        %v992 = vadd.f32 %v435, %v991
        %v993 = vpop.f32.mrf.mxu0
        %v994 = vadd.f32 %v435, %v993
        %995 = vmatmul.bf16.gmra.mxu0 %v363
        %v996 = vpop.f32.mrf.mxu0
        %v997 = vadd.f32 %v435, %v996
        %v998 = vpop.f32.mrf.mxu0
        %v999 = vadd.f32 %v435, %v998
        %1000 = vmatmul.bf16.gmra.mxu0 %v365
        %v1001 = vpop.f32.mrf.mxu0
        %v1002 = vadd.f32 %v435, %v1001
        %v1003 = vpop.f32.mrf.mxu0
        %v1004 = vadd.f32 %v435, %v1003
        %1005 = vdwg.mxu0
        %1006 = vmatpush.bf16.msra.mxu0 %v695
        %1007 = vmatpush.bf16.msra.mxu0 %v691
        %1008 = vmatpush.bf16.msra.mxu0 %v687
        %1009 = vmatpush.bf16.msra.mxu0 %v683
        %1010 = vmatpush.bf16.msra.mxu0 %v679
        %1011 = vmatpush.bf16.msra.mxu0 %v675
        %1012 = vmatpush.bf16.msra.mxu0 %v671
        %1013 = vmatpush.bf16.msra.mxu0 %v667
        %1014 = vmatmul.bf16.gmra.mxu0 %v352
        %v1015 = vpop.f32.mrf.mxu0
        %v1016 = vadd.f32 %v967, %v1015
        %v1017 = vpop.f32.mrf.mxu0
        %v1018 = vadd.f32 %v969, %v1017
        %1019 = vmatmul.bf16.gmra.mxu0 %v354
        %v1020 = vpop.f32.mrf.mxu0
        %v1021 = vadd.f32 %v972, %v1020
        %v1022 = vpop.f32.mrf.mxu0
        %v1023 = vadd.f32 %v974, %v1022
        %1024 = vmatmul.bf16.gmra.mxu0 %v356
        %v1025 = vpop.f32.mrf.mxu0
        %v1026 = vadd.f32 %v977, %v1025
        %v1027 = vpop.f32.mrf.mxu0
        %v1028 = vadd.f32 %v979, %v1027
        %1029 = vmatmul.bf16.gmra.mxu0 %v358
        %v1030 = vpop.f32.mrf.mxu0
        %v1031 = vadd.f32 %v982, %v1030
        %v1032 = vpop.f32.mrf.mxu0
        %v1033 = vadd.f32 %v984, %v1032
        %1034 = vmatmul.bf16.gmra.mxu0 %v360
        %v1035 = vpop.f32.mrf.mxu0
        %v1036 = vadd.f32 %v987, %v1035
        %v1037 = vpop.f32.mrf.mxu0
        %v1038 = vadd.f32 %v989, %v1037
        %1039 = vmatmul.bf16.gmra.mxu0 %v362
        %v1040 = vpop.f32.mrf.mxu0
        %v1041 = vadd.f32 %v992, %v1040
        %v1042 = vpop.f32.mrf.mxu0
        %v1043 = vadd.f32 %v994, %v1042
        %1044 = vmatmul.bf16.gmra.mxu0 %v364
        %v1045 = vpop.f32.mrf.mxu0
        %v1046 = vadd.f32 %v997, %v1045
        %v1047 = vpop.f32.mrf.mxu0
        %v1048 = vadd.f32 %v999, %v1047
        %1049 = vmatmul.bf16.gmra.mxu0 %v366
        %v1050 = vpop.f32.mrf.mxu0
        %v1051 = vadd.f32 %v1002, %v1050
        %v1052 = vpop.f32.mrf.mxu0
        %v1053 = vadd.f32 %v1004, %v1052
        %1054 = vdwg.mxu0
        %1055 = vmatpush.bf16.msra.mxu0 %v664
        %1056 = vmatpush.bf16.msra.mxu0 %v660
        %1057 = vmatpush.bf16.msra.mxu0 %v656
        %1058 = vmatpush.bf16.msra.mxu0 %v652
        %1059 = vmatpush.bf16.msra.mxu0 %v648
        %1060 = vmatpush.bf16.msra.mxu0 %v644
        %1061 = vmatpush.bf16.msra.mxu0 %v640
        %1062 = vmatpush.bf16.msra.mxu0 %v636
        %1063 = vmatmul.bf16.gmra.mxu0 %v351
        %v1064 = vpop.f32.mrf.mxu0
        %v1065 = vadd.f32 %v436, %v1064
        %v1066 = vpop.f32.mrf.mxu0
        %v1067 = vadd.f32 %v436, %v1066
        %1068 = vmatmul.bf16.gmra.mxu0 %v353
        %v1069 = vpop.f32.mrf.mxu0
        %v1070 = vadd.f32 %v436, %v1069
        %v1071 = vpop.f32.mrf.mxu0
        %v1072 = vadd.f32 %v436, %v1071
        %1073 = vmatmul.bf16.gmra.mxu0 %v355
        %v1074 = vpop.f32.mrf.mxu0
        %v1075 = vadd.f32 %v436, %v1074
        %v1076 = vpop.f32.mrf.mxu0
        %v1077 = vadd.f32 %v436, %v1076
        %1078 = vmatmul.bf16.gmra.mxu0 %v357
        %v1079 = vpop.f32.mrf.mxu0
        %v1080 = vadd.f32 %v436, %v1079
        %v1081 = vpop.f32.mrf.mxu0
        %v1082 = vadd.f32 %v436, %v1081
        %1083 = vmatmul.bf16.gmra.mxu0 %v359
        %v1084 = vpop.f32.mrf.mxu0
        %v1085 = vadd.f32 %v436, %v1084
        %v1086 = vpop.f32.mrf.mxu0
        %v1087 = vadd.f32 %v436, %v1086
        %1088 = vmatmul.bf16.gmra.mxu0 %v361
        %v1089 = vpop.f32.mrf.mxu0
        %v1090 = vadd.f32 %v436, %v1089
        %v1091 = vpop.f32.mrf.mxu0
        %v1092 = vadd.f32 %v436, %v1091
        %1093 = vmatmul.bf16.gmra.mxu0 %v363
        %v1094 = vpop.f32.mrf.mxu0
        %v1095 = vadd.f32 %v436, %v1094
        %v1096 = vpop.f32.mrf.mxu0
        %v1097 = vadd.f32 %v436, %v1096
        %1098 = vmatmul.bf16.gmra.mxu0 %v365
        %v1099 = vpop.f32.mrf.mxu0
        %v1100 = vadd.f32 %v436, %v1099
        %v1101 = vpop.f32.mrf.mxu0
        %v1102 = vadd.f32 %v436, %v1101
        %1103 = vdwg.mxu0
        %1104 = vmatpush.bf16.msra.mxu0 %v696
        %1105 = vmatpush.bf16.msra.mxu0 %v692
        %1106 = vmatpush.bf16.msra.mxu0 %v688
        %1107 = vmatpush.bf16.msra.mxu0 %v684
        %1108 = vmatpush.bf16.msra.mxu0 %v680
        %1109 = vmatpush.bf16.msra.mxu0 %v676
        %1110 = vmatpush.bf16.msra.mxu0 %v672
        %1111 = vmatpush.bf16.msra.mxu0 %v668
        %1112 = vmatmul.bf16.gmra.mxu0 %v352
        %v1113 = vpop.f32.mrf.mxu0
        %v1114 = vadd.f32 %v1065, %v1113
        %v1115 = vpop.f32.mrf.mxu0
        %v1116 = vadd.f32 %v1067, %v1115
        %1117 = vmatmul.bf16.gmra.mxu0 %v354
        %v1118 = vpop.f32.mrf.mxu0
        %v1119 = vadd.f32 %v1070, %v1118
        %v1120 = vpop.f32.mrf.mxu0
        %v1121 = vadd.f32 %v1072, %v1120
        %1122 = vmatmul.bf16.gmra.mxu0 %v356
        %v1123 = vpop.f32.mrf.mxu0
        %v1124 = vadd.f32 %v1075, %v1123
        %v1125 = vpop.f32.mrf.mxu0
        %v1126 = vadd.f32 %v1077, %v1125
        %1127 = vmatmul.bf16.gmra.mxu0 %v358
        %v1128 = vpop.f32.mrf.mxu0
        %v1129 = vadd.f32 %v1080, %v1128
        %v1130 = vpop.f32.mrf.mxu0
        %v1131 = vadd.f32 %v1082, %v1130
        %1132 = vmatmul.bf16.gmra.mxu0 %v360
        %v1133 = vpop.f32.mrf.mxu0
        %v1134 = vadd.f32 %v1085, %v1133
        %v1135 = vpop.f32.mrf.mxu0
        %v1136 = vadd.f32 %v1087, %v1135
        %1137 = vmatmul.bf16.gmra.mxu0 %v362
        %v1138 = vpop.f32.mrf.mxu0
        %v1139 = vadd.f32 %v1090, %v1138
        %v1140 = vpop.f32.mrf.mxu0
        %v1141 = vadd.f32 %v1092, %v1140
        %1142 = vmatmul.bf16.gmra.mxu0 %v364
        %v1143 = vpop.f32.mrf.mxu0
        %v1144 = vadd.f32 %v1095, %v1143
        %v1145 = vpop.f32.mrf.mxu0
        %v1146 = vadd.f32 %v1097, %v1145
        %1147 = vmatmul.bf16.gmra.mxu0 %v366
        %v1148 = vpop.f32.mrf.mxu0
        %v1149 = vadd.f32 %v1100, %v1148
        %v1150 = vpop.f32.mrf.mxu0
        %v1151 = vadd.f32 %v1102, %v1150
        %1152 = vdwg.mxu0
        %v1153 = vmax.f32 %v820, 0.0
        %v1154 = vmax.f32 %v918, 0.0
        %v1155 = vmax.f32 %v1016, 0.0
        %v1156 = vmax.f32 %v1114, 0.0
        %v1157 = vmax.f32 %v822, 0.0
        %v1158 = vmax.f32 %v920, 0.0
        %v1159 = vmax.f32 %v1018, 0.0
        %v1160 = vmax.f32 %v1116, 0.0
        %v1161 = vmax.f32 %v825, 0.0
        %v1162 = vmax.f32 %v923, 0.0
        %v1163 = vmax.f32 %v1021, 0.0
        %v1164 = vmax.f32 %v1119, 0.0
        %v1165 = vmax.f32 %v827, 0.0
        %v1166 = vmax.f32 %v925, 0.0
        %v1167 = vmax.f32 %v1023, 0.0
        %v1168 = vmax.f32 %v1121, 0.0
        %v1169 = vmax.f32 %v830, 0.0
        %v1170 = vmax.f32 %v928, 0.0
        %v1171 = vmax.f32 %v1026, 0.0
        %v1172 = vmax.f32 %v1124, 0.0
        %v1173 = vmax.f32 %v832, 0.0
        %v1174 = vmax.f32 %v930, 0.0
        %v1175 = vmax.f32 %v1028, 0.0
        %v1176 = vmax.f32 %v1126, 0.0
        %v1177 = vmax.f32 %v835, 0.0
        %v1178 = vmax.f32 %v933, 0.0
        %v1179 = vmax.f32 %v1031, 0.0
        %v1180 = vmax.f32 %v1129, 0.0
        %v1181 = vmax.f32 %v837, 0.0
        %v1182 = vmax.f32 %v935, 0.0
        %v1183 = vmax.f32 %v1033, 0.0
        %v1184 = vmax.f32 %v1131, 0.0
        %v1185 = vmax.f32 %v840, 0.0
        %v1186 = vmax.f32 %v938, 0.0
        %v1187 = vmax.f32 %v1036, 0.0
        %v1188 = vmax.f32 %v1134, 0.0
        %v1189 = vmax.f32 %v842, 0.0
        %v1190 = vmax.f32 %v940, 0.0
        %v1191 = vmax.f32 %v1038, 0.0
        %v1192 = vmax.f32 %v1136, 0.0
        %v1193 = vmax.f32 %v845, 0.0
        %v1194 = vmax.f32 %v943, 0.0
        %v1195 = vmax.f32 %v1041, 0.0
        %v1196 = vmax.f32 %v1139, 0.0
        %v1197 = vmax.f32 %v847, 0.0
        %v1198 = vmax.f32 %v945, 0.0
        %v1199 = vmax.f32 %v1043, 0.0
        %v1200 = vmax.f32 %v1141, 0.0
        %v1201 = vmax.f32 %v850, 0.0
        %v1202 = vmax.f32 %v948, 0.0
        %v1203 = vmax.f32 %v1046, 0.0
        %v1204 = vmax.f32 %v1144, 0.0
        %v1205 = vmax.f32 %v852, 0.0
        %v1206 = vmax.f32 %v950, 0.0
        %v1207 = vmax.f32 %v1048, 0.0
        %v1208 = vmax.f32 %v1146, 0.0
        %v1209 = vmax.f32 %v855, 0.0
        %v1210 = vmax.f32 %v953, 0.0
        %v1211 = vmax.f32 %v1051, 0.0
        %v1212 = vmax.f32 %v1149, 0.0
        %v1213 = vmax.f32 %v857, 0.0
        %v1214 = vmax.f32 %v955, 0.0
        %v1215 = vmax.f32 %v1053, 0.0
        %v1216 = vmax.f32 %v1151, 0.0
        %v1217 = vpack.c.bf16 %v1157, %v1153
        %v1218 = vpack.c.bf16 %v1158, %v1154
        %v1219 = vpack.c.bf16 %v1159, %v1155
        %v1220 = vpack.c.bf16 %v1160, %v1156
        %v1221 = vpack.c.bf16 %v1165, %v1161
        %v1222 = vpack.c.bf16 %v1166, %v1162
        %v1223 = vpack.c.bf16 %v1167, %v1163
        %v1224 = vpack.c.bf16 %v1168, %v1164
        %v1225 = vpack.c.bf16 %v1173, %v1169
        %v1226 = vpack.c.bf16 %v1174, %v1170
        %v1227 = vpack.c.bf16 %v1175, %v1171
        %v1228 = vpack.c.bf16 %v1176, %v1172
        %v1229 = vpack.c.bf16 %v1181, %v1177
        %v1230 = vpack.c.bf16 %v1182, %v1178
        %v1231 = vpack.c.bf16 %v1183, %v1179
        %v1232 = vpack.c.bf16 %v1184, %v1180
        %v1233 = vpack.c.bf16 %v1189, %v1185
        %v1234 = vpack.c.bf16 %v1190, %v1186
        %v1235 = vpack.c.bf16 %v1191, %v1187
        %v1236 = vpack.c.bf16 %v1192, %v1188
        %v1237 = vpack.c.bf16 %v1197, %v1193
        %v1238 = vpack.c.bf16 %v1198, %v1194
        %v1239 = vpack.c.bf16 %v1199, %v1195
        %v1240 = vpack.c.bf16 %v1200, %v1196
        %v1241 = vpack.c.bf16 %v1205, %v1201
        %v1242 = vpack.c.bf16 %v1206, %v1202
        %v1243 = vpack.c.bf16 %v1207, %v1203
        %v1244 = vpack.c.bf16 %v1208, %v1204
        %v1245 = vpack.c.bf16 %v1213, %v1209
        %v1246 = vpack.c.bf16 %v1214, %v1210
        %v1247 = vpack.c.bf16 %v1215, %v1211
        %v1248 = vpack.c.bf16 %v1216, %v1212
        %v1249 = vld [vmem:[#allocation2] sm:$0xff]
        %v1250 = vld [vmem:[#allocation2 + $0x8] sm:$0xff]
        %v1251 = vld [vmem:[#allocation2 + $0x10] sm:$0xff]
        %v1252 = vld [vmem:[#allocation2 + $0x18] sm:$0xff]
        %v1253 = vld [vmem:[#allocation2 + $0x20] sm:$0xff]
        %v1254 = vld [vmem:[#allocation2 + $0x28] sm:$0xff]
        %v1255 = vld [vmem:[#allocation2 + $0x30] sm:$0xff]
        %v1256 = vld [vmem:[#allocation2 + $0x38] sm:$0xff]
        %v1257 = vld [vmem:[#allocation2 + $0x40] sm:$0xff]
        %v1258 = vld [vmem:[#allocation2 + $0x48] sm:$0xff]
        %v1259 = vld [vmem:[#allocation2 + $0x50] sm:$0xff]
        %v1260 = vld [vmem:[#allocation2 + $0x58] sm:$0xff]
        %v1261 = vld [vmem:[#allocation2 + $0x60] sm:$0xff]
        %v1262 = vld [vmem:[#allocation2 + $0x68] sm:$0xff]
        %v1263 = vld [vmem:[#allocation2 + $0x70] sm:$0xff]
        %v1264 = vld [vmem:[#allocation2 + $0x78] sm:$0xff]
        %v1265 = vld [vmem:[#allocation2 + $0x80] sm:$0xff]
        %v1266 = vld [vmem:[#allocation2 + $0x88] sm:$0xff]
        %v1267 = vld [vmem:[#allocation2 + $0x90] sm:$0xff]
        %v1268 = vld [vmem:[#allocation2 + $0x98] sm:$0xff]
        %v1269 = vld [vmem:[#allocation2 + $0xa0] sm:$0xff]
        %v1270 = vld [vmem:[#allocation2 + $0xa8] sm:$0xff]
        %v1271 = vld [vmem:[#allocation2 + $0xb0] sm:$0xff]
        %v1272 = vld [vmem:[#allocation2 + $0xb8] sm:$0xff]
        %v1273 = vld [vmem:[#allocation2 + $0xc0] sm:$0xff]
        %v1274 = vld [vmem:[#allocation2 + $0xc8] sm:$0xff]
        %v1275 = vld [vmem:[#allocation2 + $0xd0] sm:$0xff]
        %v1276 = vld [vmem:[#allocation2 + $0xd8] sm:$0xff]
        %v1277 = vld [vmem:[#allocation2 + $0xe0] sm:$0xff]
        %v1278 = vld [vmem:[#allocation2 + $0xe8] sm:$0xff]
        %v1279 = vld [vmem:[#allocation2 + $0xf0] sm:$0xff]
        %v1280 = vld [vmem:[#allocation2 + $0xf8] sm:$0xff]
        %v1281 = vld [vmem:[#allocation2 + $0x100] sm:$0xff]
        %v1282 = vld [vmem:[#allocation2 + $0x108] sm:$0xff]
        %v1283 = vld [vmem:[#allocation2 + $0x110] sm:$0xff]
        %v1284 = vld [vmem:[#allocation2 + $0x118] sm:$0xff]
        %v1285 = vld [vmem:[#allocation2 + $0x120] sm:$0xff]
        %v1286 = vld [vmem:[#allocation2 + $0x128] sm:$0xff]
        %v1287 = vld [vmem:[#allocation2 + $0x130] sm:$0xff]
        %v1288 = vld [vmem:[#allocation2 + $0x138] sm:$0xff]
        %v1289 = vld [vmem:[#allocation2 + $0x140] sm:$0xff]
        %v1290 = vld [vmem:[#allocation2 + $0x148] sm:$0xff]
        %v1291 = vld [vmem:[#allocation2 + $0x150] sm:$0xff]
        %v1292 = vld [vmem:[#allocation2 + $0x158] sm:$0xff]
        %v1293 = vld [vmem:[#allocation2 + $0x160] sm:$0xff]
        %v1294 = vld [vmem:[#allocation2 + $0x168] sm:$0xff]
        %v1295 = vld [vmem:[#allocation2 + $0x170] sm:$0xff]
        %v1296 = vld [vmem:[#allocation2 + $0x178] sm:$0xff]
        %v1297 = vld [vmem:[#allocation2 + $0x180] sm:$0xff]
        %v1298 = vld [vmem:[#allocation2 + $0x188] sm:$0xff]
        %v1299 = vld [vmem:[#allocation2 + $0x190] sm:$0xff]
        %v1300 = vld [vmem:[#allocation2 + $0x198] sm:$0xff]
        %v1301 = vld [vmem:[#allocation2 + $0x1a0] sm:$0xff]
        %v1302 = vld [vmem:[#allocation2 + $0x1a8] sm:$0xff]
        %v1303 = vld [vmem:[#allocation2 + $0x1b0] sm:$0xff]
        %v1304 = vld [vmem:[#allocation2 + $0x1b8] sm:$0xff]
        %v1305 = vld [vmem:[#allocation2 + $0x1c0] sm:$0xff]
        %v1306 = vld [vmem:[#allocation2 + $0x1c8] sm:$0xff]
        %v1307 = vld [vmem:[#allocation2 + $0x1d0] sm:$0xff]
        %v1308 = vld [vmem:[#allocation2 + $0x1d8] sm:$0xff]
        %v1309 = vld [vmem:[#allocation2 + $0x1e0] sm:$0xff]
        %v1310 = vld [vmem:[#allocation2 + $0x1e8] sm:$0xff]
        %v1311 = vld [vmem:[#allocation2 + $0x1f0] sm:$0xff]
        %v1312 = vld [vmem:[#allocation2 + $0x1f8] sm:$0xff]
        %v1313 = vld [vmem:[%s4] sm:$0x3]
        %v1315 = vperm.slane %v1313, 0
        %v1316 = vperm.slane %v1313, 1
        %v1383 = vunpack.c.l.b16 %v1249
        %v1384 = vunpack.c.h.b16 %v1249
        %v1385 = vunpack.c.l.b16 %v1250
        %v1386 = vunpack.c.h.b16 %v1250
        %v1387 = vunpack.c.l.b16 %v1251
        %v1388 = vunpack.c.h.b16 %v1251
        %v1389 = vunpack.c.l.b16 %v1252
        %v1390 = vunpack.c.h.b16 %v1252
        %v1391 = vunpack.c.l.b16 %v1253
        %v1392 = vunpack.c.h.b16 %v1253
        %v1393 = vunpack.c.l.b16 %v1254
        %v1394 = vunpack.c.h.b16 %v1254
        %v1395 = vunpack.c.l.b16 %v1255
        %v1396 = vunpack.c.h.b16 %v1255
        %v1397 = vunpack.c.l.b16 %v1256
        %v1398 = vunpack.c.h.b16 %v1256
        %v1399 = vunpack.c.l.b16 %v1257
        %v1400 = vunpack.c.h.b16 %v1257
        %v1401 = vunpack.c.l.b16 %v1258
        %v1402 = vunpack.c.h.b16 %v1258
        %v1403 = vunpack.c.l.b16 %v1259
        %v1404 = vunpack.c.h.b16 %v1259
        %v1405 = vunpack.c.l.b16 %v1260
        %v1406 = vunpack.c.h.b16 %v1260
        %v1407 = vunpack.c.l.b16 %v1261
        %v1408 = vunpack.c.h.b16 %v1261
        %v1409 = vunpack.c.l.b16 %v1262
        %v1410 = vunpack.c.h.b16 %v1262
        %v1411 = vunpack.c.l.b16 %v1263
        %v1412 = vunpack.c.h.b16 %v1263
        %v1413 = vunpack.c.l.b16 %v1264
        %v1414 = vunpack.c.h.b16 %v1264
        %v1415 = vunpack.c.l.b16 %v1265
        %v1416 = vunpack.c.h.b16 %v1265
        %v1417 = vunpack.c.l.b16 %v1266
        %v1418 = vunpack.c.h.b16 %v1266
        %v1419 = vunpack.c.l.b16 %v1267
        %v1420 = vunpack.c.h.b16 %v1267
        %v1421 = vunpack.c.l.b16 %v1268
        %v1422 = vunpack.c.h.b16 %v1268
        %v1423 = vunpack.c.l.b16 %v1269
        %v1424 = vunpack.c.h.b16 %v1269
        %v1425 = vunpack.c.l.b16 %v1270
        %v1426 = vunpack.c.h.b16 %v1270
        %v1427 = vunpack.c.l.b16 %v1271
        %v1428 = vunpack.c.h.b16 %v1271
        %v1429 = vunpack.c.l.b16 %v1272
        %v1430 = vunpack.c.h.b16 %v1272
        %v1431 = vunpack.c.l.b16 %v1273
        %v1432 = vunpack.c.h.b16 %v1273
        %v1433 = vunpack.c.l.b16 %v1274
        %v1434 = vunpack.c.h.b16 %v1274
        %v1435 = vunpack.c.l.b16 %v1275
        %v1436 = vunpack.c.h.b16 %v1275
        %v1437 = vunpack.c.l.b16 %v1276
        %v1438 = vunpack.c.h.b16 %v1276
        %v1439 = vunpack.c.l.b16 %v1277
        %v1440 = vunpack.c.h.b16 %v1277
        %v1441 = vunpack.c.l.b16 %v1278
        %v1442 = vunpack.c.h.b16 %v1278
        %v1443 = vunpack.c.l.b16 %v1279
        %v1444 = vunpack.c.h.b16 %v1279
        %v1445 = vunpack.c.l.b16 %v1280
        %v1446 = vunpack.c.h.b16 %v1280
        %v1447 = vunpack.c.l.b16 %v1281
        %v1448 = vunpack.c.h.b16 %v1281
        %v1449 = vunpack.c.l.b16 %v1282
        %v1450 = vunpack.c.h.b16 %v1282
        %v1451 = vunpack.c.l.b16 %v1283
        %v1452 = vunpack.c.h.b16 %v1283
        %v1453 = vunpack.c.l.b16 %v1284
        %v1454 = vunpack.c.h.b16 %v1284
        %v1455 = vunpack.c.l.b16 %v1285
        %v1456 = vunpack.c.h.b16 %v1285
        %v1457 = vunpack.c.l.b16 %v1286
        %v1458 = vunpack.c.h.b16 %v1286
        %v1459 = vunpack.c.l.b16 %v1287
        %v1460 = vunpack.c.h.b16 %v1287
        %v1461 = vunpack.c.l.b16 %v1288
        %v1462 = vunpack.c.h.b16 %v1288
        %v1463 = vunpack.c.l.b16 %v1289
        %v1464 = vunpack.c.h.b16 %v1289
        %v1465 = vunpack.c.l.b16 %v1290
        %v1466 = vunpack.c.h.b16 %v1290
        %v1467 = vunpack.c.l.b16 %v1291
        %v1468 = vunpack.c.h.b16 %v1291
        %v1469 = vunpack.c.l.b16 %v1292
        %v1470 = vunpack.c.h.b16 %v1292
        %v1471 = vunpack.c.l.b16 %v1293
        %v1472 = vunpack.c.h.b16 %v1293
        %v1473 = vunpack.c.l.b16 %v1294
        %v1474 = vunpack.c.h.b16 %v1294
        %v1475 = vunpack.c.l.b16 %v1295
        %v1476 = vunpack.c.h.b16 %v1295
        %v1477 = vunpack.c.l.b16 %v1296
        %v1478 = vunpack.c.h.b16 %v1296
        %v1479 = vunpack.c.l.b16 %v1297
        %v1480 = vunpack.c.h.b16 %v1297
        %v1481 = vunpack.c.l.b16 %v1298
        %v1482 = vunpack.c.h.b16 %v1298
        %v1483 = vunpack.c.l.b16 %v1299
        %v1484 = vunpack.c.h.b16 %v1299
        %v1485 = vunpack.c.l.b16 %v1300
        %v1486 = vunpack.c.h.b16 %v1300
        %v1487 = vunpack.c.l.b16 %v1301
        %v1488 = vunpack.c.h.b16 %v1301
        %v1489 = vunpack.c.l.b16 %v1302
        %v1490 = vunpack.c.h.b16 %v1302
        %v1491 = vunpack.c.l.b16 %v1303
        %v1492 = vunpack.c.h.b16 %v1303
        %v1493 = vunpack.c.l.b16 %v1304
        %v1494 = vunpack.c.h.b16 %v1304
        %v1495 = vunpack.c.l.b16 %v1305
        %v1496 = vunpack.c.h.b16 %v1305
        %v1497 = vunpack.c.l.b16 %v1306
        %v1498 = vunpack.c.h.b16 %v1306
        %v1499 = vunpack.c.l.b16 %v1307
        %v1500 = vunpack.c.h.b16 %v1307
        %v1501 = vunpack.c.l.b16 %v1308
        %v1502 = vunpack.c.h.b16 %v1308
        %v1503 = vunpack.c.l.b16 %v1309
        %v1504 = vunpack.c.h.b16 %v1309
        %v1505 = vunpack.c.l.b16 %v1310
        %v1506 = vunpack.c.h.b16 %v1310
        %v1507 = vunpack.c.l.b16 %v1311
        %v1508 = vunpack.c.h.b16 %v1311
        %v1509 = vunpack.c.l.b16 %v1312
        %v1510 = vunpack.c.h.b16 %v1312
        %v1511 = vpack.c.b16 %v1385, %v1383
        %v1512 = vpack.c.b16 %v1386, %v1384
        %v1513 = vpack.c.b16 %v1389, %v1387
        %v1514 = vpack.c.b16 %v1390, %v1388
        %v1515 = vpack.c.b16 %v1393, %v1391
        %v1516 = vpack.c.b16 %v1394, %v1392
        %v1517 = vpack.c.b16 %v1397, %v1395
        %v1518 = vpack.c.b16 %v1398, %v1396
        %v1519 = vpack.c.b16 %v1401, %v1399
        %v1520 = vpack.c.b16 %v1402, %v1400
        %v1521 = vpack.c.b16 %v1405, %v1403
        %v1522 = vpack.c.b16 %v1406, %v1404
        %v1523 = vpack.c.b16 %v1409, %v1407
        %v1524 = vpack.c.b16 %v1410, %v1408
        %v1525 = vpack.c.b16 %v1413, %v1411
        %v1526 = vpack.c.b16 %v1414, %v1412
        %v1527 = vpack.c.b16 %v1417, %v1415
        %v1528 = vpack.c.b16 %v1418, %v1416
        %v1529 = vpack.c.b16 %v1421, %v1419
        %v1530 = vpack.c.b16 %v1422, %v1420
        %v1531 = vpack.c.b16 %v1425, %v1423
        %v1532 = vpack.c.b16 %v1426, %v1424
        %v1533 = vpack.c.b16 %v1429, %v1427
        %v1534 = vpack.c.b16 %v1430, %v1428
        %v1535 = vpack.c.b16 %v1433, %v1431
        %v1536 = vpack.c.b16 %v1434, %v1432
        %v1537 = vpack.c.b16 %v1437, %v1435
        %v1538 = vpack.c.b16 %v1438, %v1436
        %v1539 = vpack.c.b16 %v1441, %v1439
        %v1540 = vpack.c.b16 %v1442, %v1440
        %v1541 = vpack.c.b16 %v1445, %v1443
        %v1542 = vpack.c.b16 %v1446, %v1444
        %v1543 = vpack.c.b16 %v1449, %v1447
        %v1544 = vpack.c.b16 %v1450, %v1448
        %v1545 = vpack.c.b16 %v1453, %v1451
        %v1546 = vpack.c.b16 %v1454, %v1452
        %v1547 = vpack.c.b16 %v1457, %v1455
        %v1548 = vpack.c.b16 %v1458, %v1456
        %v1549 = vpack.c.b16 %v1461, %v1459
        %v1550 = vpack.c.b16 %v1462, %v1460
        %v1551 = vpack.c.b16 %v1465, %v1463
        %v1552 = vpack.c.b16 %v1466, %v1464
        %v1553 = vpack.c.b16 %v1469, %v1467
        %v1554 = vpack.c.b16 %v1470, %v1468
        %v1555 = vpack.c.b16 %v1473, %v1471
        %v1556 = vpack.c.b16 %v1474, %v1472
        %v1557 = vpack.c.b16 %v1477, %v1475
        %v1558 = vpack.c.b16 %v1478, %v1476
        %v1559 = vpack.c.b16 %v1481, %v1479
        %v1560 = vpack.c.b16 %v1482, %v1480
        %v1561 = vpack.c.b16 %v1485, %v1483
        %v1562 = vpack.c.b16 %v1486, %v1484
        %v1563 = vpack.c.b16 %v1489, %v1487
        %v1564 = vpack.c.b16 %v1490, %v1488
        %v1565 = vpack.c.b16 %v1493, %v1491
        %v1566 = vpack.c.b16 %v1494, %v1492
        %v1567 = vpack.c.b16 %v1497, %v1495
        %v1568 = vpack.c.b16 %v1498, %v1496
        %v1569 = vpack.c.b16 %v1501, %v1499
        %v1570 = vpack.c.b16 %v1502, %v1500
        %v1571 = vpack.c.b16 %v1505, %v1503
        %v1572 = vpack.c.b16 %v1506, %v1504
        %v1573 = vpack.c.b16 %v1509, %v1507
        %v1574 = vpack.c.b16 %v1510, %v1508
        %1639 = vmatpush.bf16.msra.mxu0 %v1525
        %1640 = vmatpush.bf16.msra.mxu0 %v1523
        %1641 = vmatpush.bf16.msra.mxu0 %v1521
        %1642 = vmatpush.bf16.msra.mxu0 %v1519
        %1643 = vmatpush.bf16.msra.mxu0 %v1517
        %1644 = vmatpush.bf16.msra.mxu0 %v1515
        %1645 = vmatpush.bf16.msra.mxu0 %v1513
        %1646 = vmatpush.bf16.msra.mxu0 %v1511
        %1647 = vmatmul.bf16.gmra.mxu0 %v1217
        %v1648 = vpop.f32.mrf.mxu0
        %v1649 = vadd.f32 %v1315, %v1648
        %v1650 = vpop.f32.mrf.mxu0
        %v1651 = vadd.f32 %v1315, %v1650
        %1652 = vmatmul.bf16.gmra.mxu0 %v1221
        %v1653 = vpop.f32.mrf.mxu0
        %v1654 = vadd.f32 %v1315, %v1653
        %v1655 = vpop.f32.mrf.mxu0
        %v1656 = vadd.f32 %v1315, %v1655
        %1657 = vmatmul.bf16.gmra.mxu0 %v1225
        %v1658 = vpop.f32.mrf.mxu0
        %v1659 = vadd.f32 %v1315, %v1658
        %v1660 = vpop.f32.mrf.mxu0
        %v1661 = vadd.f32 %v1315, %v1660
        %1662 = vmatmul.bf16.gmra.mxu0 %v1229
        %v1663 = vpop.f32.mrf.mxu0
        %v1664 = vadd.f32 %v1315, %v1663
        %v1665 = vpop.f32.mrf.mxu0
        %v1666 = vadd.f32 %v1315, %v1665
        %1667 = vmatmul.bf16.gmra.mxu0 %v1233
        %v1668 = vpop.f32.mrf.mxu0
        %v1669 = vadd.f32 %v1315, %v1668
        %v1670 = vpop.f32.mrf.mxu0
        %v1671 = vadd.f32 %v1315, %v1670
        %1672 = vmatmul.bf16.gmra.mxu0 %v1237
        %v1673 = vpop.f32.mrf.mxu0
        %v1674 = vadd.f32 %v1315, %v1673
        %v1675 = vpop.f32.mrf.mxu0
        %v1676 = vadd.f32 %v1315, %v1675
        %1677 = vmatmul.bf16.gmra.mxu0 %v1241
        %v1678 = vpop.f32.mrf.mxu0
        %v1679 = vadd.f32 %v1315, %v1678
        %v1680 = vpop.f32.mrf.mxu0
        %v1681 = vadd.f32 %v1315, %v1680
        %1682 = vmatmul.bf16.gmra.mxu0 %v1245
        %v1683 = vpop.f32.mrf.mxu0
        %v1684 = vadd.f32 %v1315, %v1683
        %v1685 = vpop.f32.mrf.mxu0
        %v1686 = vadd.f32 %v1315, %v1685
        %1687 = vdwg.mxu0
        %1688 = vmatpush.bf16.msra.mxu0 %v1541
        %1689 = vmatpush.bf16.msra.mxu0 %v1539
        %1690 = vmatpush.bf16.msra.mxu0 %v1537
        %1691 = vmatpush.bf16.msra.mxu0 %v1535
        %1692 = vmatpush.bf16.msra.mxu0 %v1533
        %1693 = vmatpush.bf16.msra.mxu0 %v1531
        %1694 = vmatpush.bf16.msra.mxu0 %v1529
        %1695 = vmatpush.bf16.msra.mxu0 %v1527
        %1696 = vmatmul.bf16.gmra.mxu0 %v1218
        %v1697 = vpop.f32.mrf.mxu0
        %v1698 = vadd.f32 %v1649, %v1697
        %v1699 = vpop.f32.mrf.mxu0
        %v1700 = vadd.f32 %v1651, %v1699
        %1701 = vmatmul.bf16.gmra.mxu0 %v1222
        %v1702 = vpop.f32.mrf.mxu0
        %v1703 = vadd.f32 %v1654, %v1702
        %v1704 = vpop.f32.mrf.mxu0
        %v1705 = vadd.f32 %v1656, %v1704
        %1706 = vmatmul.bf16.gmra.mxu0 %v1226
        %v1707 = vpop.f32.mrf.mxu0
        %v1708 = vadd.f32 %v1659, %v1707
        %v1709 = vpop.f32.mrf.mxu0
        %v1710 = vadd.f32 %v1661, %v1709
        %1711 = vmatmul.bf16.gmra.mxu0 %v1230
        %v1712 = vpop.f32.mrf.mxu0
        %v1713 = vadd.f32 %v1664, %v1712
        %v1714 = vpop.f32.mrf.mxu0
        %v1715 = vadd.f32 %v1666, %v1714
        %1716 = vmatmul.bf16.gmra.mxu0 %v1234
        %v1717 = vpop.f32.mrf.mxu0
        %v1718 = vadd.f32 %v1669, %v1717
        %v1719 = vpop.f32.mrf.mxu0
        %v1720 = vadd.f32 %v1671, %v1719
        %1721 = vmatmul.bf16.gmra.mxu0 %v1238
        %v1722 = vpop.f32.mrf.mxu0
        %v1723 = vadd.f32 %v1674, %v1722
        %v1724 = vpop.f32.mrf.mxu0
        %v1725 = vadd.f32 %v1676, %v1724
        %1726 = vmatmul.bf16.gmra.mxu0 %v1242
        %v1727 = vpop.f32.mrf.mxu0
        %v1728 = vadd.f32 %v1679, %v1727
        %v1729 = vpop.f32.mrf.mxu0
        %v1730 = vadd.f32 %v1681, %v1729
        %1731 = vmatmul.bf16.gmra.mxu0 %v1246
        %v1732 = vpop.f32.mrf.mxu0
        %v1733 = vadd.f32 %v1684, %v1732
        %v1734 = vpop.f32.mrf.mxu0
        %v1735 = vadd.f32 %v1686, %v1734
        %1736 = vdwg.mxu0
        %1737 = vmatpush.bf16.msra.mxu0 %v1557
        %1738 = vmatpush.bf16.msra.mxu0 %v1555
        %1739 = vmatpush.bf16.msra.mxu0 %v1553
        %1740 = vmatpush.bf16.msra.mxu0 %v1551
        %1741 = vmatpush.bf16.msra.mxu0 %v1549
        %1742 = vmatpush.bf16.msra.mxu0 %v1547
        %1743 = vmatpush.bf16.msra.mxu0 %v1545
        %1744 = vmatpush.bf16.msra.mxu0 %v1543
        %1745 = vmatmul.bf16.gmra.mxu0 %v1219
        %v1746 = vpop.f32.mrf.mxu0
        %v1747 = vadd.f32 %v1698, %v1746
        %v1748 = vpop.f32.mrf.mxu0
        %v1749 = vadd.f32 %v1700, %v1748
        %1750 = vmatmul.bf16.gmra.mxu0 %v1223
        %v1751 = vpop.f32.mrf.mxu0
        %v1752 = vadd.f32 %v1703, %v1751
        %v1753 = vpop.f32.mrf.mxu0
        %v1754 = vadd.f32 %v1705, %v1753
        %1755 = vmatmul.bf16.gmra.mxu0 %v1227
        %v1756 = vpop.f32.mrf.mxu0
        %v1757 = vadd.f32 %v1708, %v1756
        %v1758 = vpop.f32.mrf.mxu0
        %v1759 = vadd.f32 %v1710, %v1758
        %1760 = vmatmul.bf16.gmra.mxu0 %v1231
        %v1761 = vpop.f32.mrf.mxu0
        %v1762 = vadd.f32 %v1713, %v1761
        %v1763 = vpop.f32.mrf.mxu0
        %v1764 = vadd.f32 %v1715, %v1763
        %1765 = vmatmul.bf16.gmra.mxu0 %v1235
        %v1766 = vpop.f32.mrf.mxu0
        %v1767 = vadd.f32 %v1718, %v1766
        %v1768 = vpop.f32.mrf.mxu0
        %v1769 = vadd.f32 %v1720, %v1768
        %1770 = vmatmul.bf16.gmra.mxu0 %v1239
        %v1771 = vpop.f32.mrf.mxu0
        %v1772 = vadd.f32 %v1723, %v1771
        %v1773 = vpop.f32.mrf.mxu0
        %v1774 = vadd.f32 %v1725, %v1773
        %1775 = vmatmul.bf16.gmra.mxu0 %v1243
        %v1776 = vpop.f32.mrf.mxu0
        %v1777 = vadd.f32 %v1728, %v1776
        %v1778 = vpop.f32.mrf.mxu0
        %v1779 = vadd.f32 %v1730, %v1778
        %1780 = vmatmul.bf16.gmra.mxu0 %v1247
        %v1781 = vpop.f32.mrf.mxu0
        %v1782 = vadd.f32 %v1733, %v1781
        %v1783 = vpop.f32.mrf.mxu0
        %v1784 = vadd.f32 %v1735, %v1783
        %1785 = vdwg.mxu0
        %1786 = vmatpush.bf16.msra.mxu0 %v1573
        %1787 = vmatpush.bf16.msra.mxu0 %v1571
        %1788 = vmatpush.bf16.msra.mxu0 %v1569
        %1789 = vmatpush.bf16.msra.mxu0 %v1567
        %1790 = vmatpush.bf16.msra.mxu0 %v1565
        %1791 = vmatpush.bf16.msra.mxu0 %v1563
        %1792 = vmatpush.bf16.msra.mxu0 %v1561
        %1793 = vmatpush.bf16.msra.mxu0 %v1559
        %1794 = vmatmul.bf16.gmra.mxu0 %v1220
        %v1795 = vpop.f32.mrf.mxu0
        %v1796 = vadd.f32 %v1747, %v1795
        %v1797 = vpop.f32.mrf.mxu0
        %v1798 = vadd.f32 %v1749, %v1797
        %1799 = vmatmul.bf16.gmra.mxu0 %v1224
        %v1800 = vpop.f32.mrf.mxu0
        %v1801 = vadd.f32 %v1752, %v1800
        %v1802 = vpop.f32.mrf.mxu0
        %v1803 = vadd.f32 %v1754, %v1802
        %1804 = vmatmul.bf16.gmra.mxu0 %v1228
        %v1805 = vpop.f32.mrf.mxu0
        %v1806 = vadd.f32 %v1757, %v1805
        %v1807 = vpop.f32.mrf.mxu0
        %v1808 = vadd.f32 %v1759, %v1807
        %1809 = vmatmul.bf16.gmra.mxu0 %v1232
        %v1810 = vpop.f32.mrf.mxu0
        %v1811 = vadd.f32 %v1762, %v1810
        %v1812 = vpop.f32.mrf.mxu0
        %v1813 = vadd.f32 %v1764, %v1812
        %1814 = vmatmul.bf16.gmra.mxu0 %v1236
        %v1815 = vpop.f32.mrf.mxu0
        %v1816 = vadd.f32 %v1767, %v1815
        %v1817 = vpop.f32.mrf.mxu0
        %v1818 = vadd.f32 %v1769, %v1817
        %1819 = vmatmul.bf16.gmra.mxu0 %v1240
        %v1820 = vpop.f32.mrf.mxu0
        %v1821 = vadd.f32 %v1772, %v1820
        %v1822 = vpop.f32.mrf.mxu0
        %v1823 = vadd.f32 %v1774, %v1822
        %1824 = vmatmul.bf16.gmra.mxu0 %v1244
        %v1825 = vpop.f32.mrf.mxu0
        %v1826 = vadd.f32 %v1777, %v1825
        %v1827 = vpop.f32.mrf.mxu0
        %v1828 = vadd.f32 %v1779, %v1827
        %1829 = vmatmul.bf16.gmra.mxu0 %v1248
        %v1830 = vpop.f32.mrf.mxu0
        %v1831 = vadd.f32 %v1782, %v1830
        %v1832 = vpop.f32.mrf.mxu0
        %v1833 = vadd.f32 %v1784, %v1832
        %1834 = vdwg.mxu0
        %1835 = vmatpush.bf16.msra.mxu0 %v1526
        %1836 = vmatpush.bf16.msra.mxu0 %v1524
        %1837 = vmatpush.bf16.msra.mxu0 %v1522
        %1838 = vmatpush.bf16.msra.mxu0 %v1520
        %1839 = vmatpush.bf16.msra.mxu0 %v1518
        %1840 = vmatpush.bf16.msra.mxu0 %v1516
        %1841 = vmatpush.bf16.msra.mxu0 %v1514
        %1842 = vmatpush.bf16.msra.mxu0 %v1512
        %1843 = vmatmul.bf16.gmra.mxu0 %v1217
        %v1844 = vpop.f32.mrf.mxu0
        %v1845 = vadd.f32 %v1316, %v1844
        %v1846 = vpop.f32.mrf.mxu0
        %v1847 = vadd.f32 %v1316, %v1846
        %1848 = vmatmul.bf16.gmra.mxu0 %v1221
        %v1849 = vpop.f32.mrf.mxu0
        %v1850 = vadd.f32 %v1316, %v1849
        %v1851 = vpop.f32.mrf.mxu0
        %v1852 = vadd.f32 %v1316, %v1851
        %1853 = vmatmul.bf16.gmra.mxu0 %v1225
        %v1854 = vpop.f32.mrf.mxu0
        %v1855 = vadd.f32 %v1316, %v1854
        %v1856 = vpop.f32.mrf.mxu0
        %v1857 = vadd.f32 %v1316, %v1856
        %1858 = vmatmul.bf16.gmra.mxu0 %v1229
        %v1859 = vpop.f32.mrf.mxu0
        %v1860 = vadd.f32 %v1316, %v1859
        %v1861 = vpop.f32.mrf.mxu0
        %v1862 = vadd.f32 %v1316, %v1861
        %1863 = vmatmul.bf16.gmra.mxu0 %v1233
        %v1864 = vpop.f32.mrf.mxu0
        %v1865 = vadd.f32 %v1316, %v1864
        %v1866 = vpop.f32.mrf.mxu0
        %v1867 = vadd.f32 %v1316, %v1866
        %1868 = vmatmul.bf16.gmra.mxu0 %v1237
        %v1869 = vpop.f32.mrf.mxu0
        %v1870 = vadd.f32 %v1316, %v1869
        %v1871 = vpop.f32.mrf.mxu0
        %v1872 = vadd.f32 %v1316, %v1871
        %1873 = vmatmul.bf16.gmra.mxu0 %v1241
        %v1874 = vpop.f32.mrf.mxu0
        %v1875 = vadd.f32 %v1316, %v1874
        %v1876 = vpop.f32.mrf.mxu0
        %v1877 = vadd.f32 %v1316, %v1876
        %1878 = vmatmul.bf16.gmra.mxu0 %v1245
        %v1879 = vpop.f32.mrf.mxu0
        %v1880 = vadd.f32 %v1316, %v1879
        %v1881 = vpop.f32.mrf.mxu0
        %v1882 = vadd.f32 %v1316, %v1881
        %1883 = vdwg.mxu0
        %1884 = vmatpush.bf16.msra.mxu0 %v1542
        %1885 = vmatpush.bf16.msra.mxu0 %v1540
        %1886 = vmatpush.bf16.msra.mxu0 %v1538
        %1887 = vmatpush.bf16.msra.mxu0 %v1536
        %1888 = vmatpush.bf16.msra.mxu0 %v1534
        %1889 = vmatpush.bf16.msra.mxu0 %v1532
        %1890 = vmatpush.bf16.msra.mxu0 %v1530
        %1891 = vmatpush.bf16.msra.mxu0 %v1528
        %1892 = vmatmul.bf16.gmra.mxu0 %v1218
        %v1893 = vpop.f32.mrf.mxu0
        %v1894 = vadd.f32 %v1845, %v1893
        %v1895 = vpop.f32.mrf.mxu0
        %v1896 = vadd.f32 %v1847, %v1895
        %1897 = vmatmul.bf16.gmra.mxu0 %v1222
        %v1898 = vpop.f32.mrf.mxu0
        %v1899 = vadd.f32 %v1850, %v1898
        %v1900 = vpop.f32.mrf.mxu0
        %v1901 = vadd.f32 %v1852, %v1900
        %1902 = vmatmul.bf16.gmra.mxu0 %v1226
        %v1903 = vpop.f32.mrf.mxu0
        %v1904 = vadd.f32 %v1855, %v1903
        %v1905 = vpop.f32.mrf.mxu0
        %v1906 = vadd.f32 %v1857, %v1905
        %1907 = vmatmul.bf16.gmra.mxu0 %v1230
        %v1908 = vpop.f32.mrf.mxu0
        %v1909 = vadd.f32 %v1860, %v1908
        %v1910 = vpop.f32.mrf.mxu0
        %v1911 = vadd.f32 %v1862, %v1910
        %1912 = vmatmul.bf16.gmra.mxu0 %v1234
        %v1913 = vpop.f32.mrf.mxu0
        %v1914 = vadd.f32 %v1865, %v1913
        %v1915 = vpop.f32.mrf.mxu0
        %v1916 = vadd.f32 %v1867, %v1915
        %1917 = vmatmul.bf16.gmra.mxu0 %v1238
        %v1918 = vpop.f32.mrf.mxu0
        %v1919 = vadd.f32 %v1870, %v1918
        %v1920 = vpop.f32.mrf.mxu0
        %v1921 = vadd.f32 %v1872, %v1920
        %1922 = vmatmul.bf16.gmra.mxu0 %v1242
        %v1923 = vpop.f32.mrf.mxu0
        %v1924 = vadd.f32 %v1875, %v1923
        %v1925 = vpop.f32.mrf.mxu0
        %v1926 = vadd.f32 %v1877, %v1925
        %1927 = vmatmul.bf16.gmra.mxu0 %v1246
        %v1928 = vpop.f32.mrf.mxu0
        %v1929 = vadd.f32 %v1880, %v1928
        %v1930 = vpop.f32.mrf.mxu0
        %v1931 = vadd.f32 %v1882, %v1930
        %1932 = vdwg.mxu0
        %1933 = vmatpush.bf16.msra.mxu0 %v1558
        %1934 = vmatpush.bf16.msra.mxu0 %v1556
        %1935 = vmatpush.bf16.msra.mxu0 %v1554
        %1936 = vmatpush.bf16.msra.mxu0 %v1552
        %1937 = vmatpush.bf16.msra.mxu0 %v1550
        %1938 = vmatpush.bf16.msra.mxu0 %v1548
        %1939 = vmatpush.bf16.msra.mxu0 %v1546
        %1940 = vmatpush.bf16.msra.mxu0 %v1544
        %1941 = vmatmul.bf16.gmra.mxu0 %v1219
        %v1942 = vpop.f32.mrf.mxu0
        %v1943 = vadd.f32 %v1894, %v1942
        %v1944 = vpop.f32.mrf.mxu0
        %v1945 = vadd.f32 %v1896, %v1944
        %1946 = vmatmul.bf16.gmra.mxu0 %v1223
        %v1947 = vpop.f32.mrf.mxu0
        %v1948 = vadd.f32 %v1899, %v1947
        %v1949 = vpop.f32.mrf.mxu0
        %v1950 = vadd.f32 %v1901, %v1949
        %1951 = vmatmul.bf16.gmra.mxu0 %v1227
        %v1952 = vpop.f32.mrf.mxu0
        %v1953 = vadd.f32 %v1904, %v1952
        %v1954 = vpop.f32.mrf.mxu0
        %v1955 = vadd.f32 %v1906, %v1954
        %1956 = vmatmul.bf16.gmra.mxu0 %v1231
        %v1957 = vpop.f32.mrf.mxu0
        %v1958 = vadd.f32 %v1909, %v1957
        %v1959 = vpop.f32.mrf.mxu0
        %v1960 = vadd.f32 %v1911, %v1959
        %1961 = vmatmul.bf16.gmra.mxu0 %v1235
        %v1962 = vpop.f32.mrf.mxu0
        %v1963 = vadd.f32 %v1914, %v1962
        %v1964 = vpop.f32.mrf.mxu0
        %v1965 = vadd.f32 %v1916, %v1964
        %1966 = vmatmul.bf16.gmra.mxu0 %v1239
        %v1967 = vpop.f32.mrf.mxu0
        %v1968 = vadd.f32 %v1919, %v1967
        %v1969 = vpop.f32.mrf.mxu0
        %v1970 = vadd.f32 %v1921, %v1969
        %1971 = vmatmul.bf16.gmra.mxu0 %v1243
        %v1972 = vpop.f32.mrf.mxu0
        %v1973 = vadd.f32 %v1924, %v1972
        %v1974 = vpop.f32.mrf.mxu0
        %v1975 = vadd.f32 %v1926, %v1974
        %1976 = vmatmul.bf16.gmra.mxu0 %v1247
        %v1977 = vpop.f32.mrf.mxu0
        %v1978 = vadd.f32 %v1929, %v1977
        %v1979 = vpop.f32.mrf.mxu0
        %v1980 = vadd.f32 %v1931, %v1979
        %1981 = vdwg.mxu0
        %1982 = vmatpush.bf16.msra.mxu0 %v1574
        %1983 = vmatpush.bf16.msra.mxu0 %v1572
        %1984 = vmatpush.bf16.msra.mxu0 %v1570
        %1985 = vmatpush.bf16.msra.mxu0 %v1568
        %1986 = vmatpush.bf16.msra.mxu0 %v1566
        %1987 = vmatpush.bf16.msra.mxu0 %v1564
        %1988 = vmatpush.bf16.msra.mxu0 %v1562
        %1989 = vmatpush.bf16.msra.mxu0 %v1560
        %1990 = vmatmul.bf16.gmra.mxu0 %v1220
        %v1991 = vpop.f32.mrf.mxu0
        %v1992 = vadd.f32 %v1943, %v1991
        %v1993 = vpop.f32.mrf.mxu0
        %v1994 = vadd.f32 %v1945, %v1993
        %1995 = vmatmul.bf16.gmra.mxu0 %v1224
        %v1996 = vpop.f32.mrf.mxu0
        %v1997 = vadd.f32 %v1948, %v1996
        %v1998 = vpop.f32.mrf.mxu0
        %v1999 = vadd.f32 %v1950, %v1998
        %2000 = vmatmul.bf16.gmra.mxu0 %v1228
        %v2001 = vpop.f32.mrf.mxu0
        %v2002 = vadd.f32 %v1953, %v2001
        %v2003 = vpop.f32.mrf.mxu0
        %v2004 = vadd.f32 %v1955, %v2003
        %2005 = vmatmul.bf16.gmra.mxu0 %v1232
        %v2006 = vpop.f32.mrf.mxu0
        %v2007 = vadd.f32 %v1958, %v2006
        %v2008 = vpop.f32.mrf.mxu0
        %v2009 = vadd.f32 %v1960, %v2008
        %2010 = vmatmul.bf16.gmra.mxu0 %v1236
        %v2011 = vpop.f32.mrf.mxu0
        %v2012 = vadd.f32 %v1963, %v2011
        %v2013 = vpop.f32.mrf.mxu0
        %v2014 = vadd.f32 %v1965, %v2013
        %2015 = vmatmul.bf16.gmra.mxu0 %v1240
        %v2016 = vpop.f32.mrf.mxu0
        %v2017 = vadd.f32 %v1968, %v2016
        %v2018 = vpop.f32.mrf.mxu0
        %v2019 = vadd.f32 %v1970, %v2018
        %2020 = vmatmul.bf16.gmra.mxu0 %v1244
        %v2021 = vpop.f32.mrf.mxu0
        %v2022 = vadd.f32 %v1973, %v2021
        %v2023 = vpop.f32.mrf.mxu0
        %v2024 = vadd.f32 %v1975, %v2023
        %2025 = vmatmul.bf16.gmra.mxu0 %v1248
        %v2026 = vpop.f32.mrf.mxu0
        %v2027 = vadd.f32 %v1978, %v2026
        %v2028 = vpop.f32.mrf.mxu0
        %v2029 = vadd.f32 %v1980, %v2028
        %2030 = vdwg.mxu0
        %v2031 = vmax.f32 %v1796, 0.0
        %v2032 = vmax.f32 %v1992, 0.0
        %v2033 = vmax.f32 %v1798, 0.0
        %v2034 = vmax.f32 %v1994, 0.0
        %v2035 = vmax.f32 %v1801, 0.0
        %v2036 = vmax.f32 %v1997, 0.0
        %v2037 = vmax.f32 %v1803, 0.0
        %v2038 = vmax.f32 %v1999, 0.0
        %v2039 = vmax.f32 %v1806, 0.0
        %v2040 = vmax.f32 %v2002, 0.0
        %v2041 = vmax.f32 %v1808, 0.0
        %v2042 = vmax.f32 %v2004, 0.0
        %v2043 = vmax.f32 %v1811, 0.0
        %v2044 = vmax.f32 %v2007, 0.0
        %v2045 = vmax.f32 %v1813, 0.0
        %v2046 = vmax.f32 %v2009, 0.0
        %v2047 = vmax.f32 %v1816, 0.0
        %v2048 = vmax.f32 %v2012, 0.0
        %v2049 = vmax.f32 %v1818, 0.0
        %v2050 = vmax.f32 %v2014, 0.0
        %v2051 = vmax.f32 %v1821, 0.0
        %v2052 = vmax.f32 %v2017, 0.0
        %v2053 = vmax.f32 %v1823, 0.0
        %v2054 = vmax.f32 %v2019, 0.0
        %v2055 = vmax.f32 %v1826, 0.0
        %v2056 = vmax.f32 %v2022, 0.0
        %v2057 = vmax.f32 %v1828, 0.0
        %v2058 = vmax.f32 %v2024, 0.0
        %v2059 = vmax.f32 %v1831, 0.0
        %v2060 = vmax.f32 %v2027, 0.0
        %v2061 = vmax.f32 %v1833, 0.0
        %v2062 = vmax.f32 %v2029, 0.0
        %v2063 = vpack.c.bf16 %v2033, %v2031
        %v2064 = vpack.c.bf16 %v2034, %v2032
        %v2065 = vpack.c.bf16 %v2037, %v2035
        %v2066 = vpack.c.bf16 %v2038, %v2036
        %v2067 = vpack.c.bf16 %v2041, %v2039
        %v2068 = vpack.c.bf16 %v2042, %v2040
        %v2069 = vpack.c.bf16 %v2045, %v2043
        %v2070 = vpack.c.bf16 %v2046, %v2044
        %v2071 = vpack.c.bf16 %v2049, %v2047
        %v2072 = vpack.c.bf16 %v2050, %v2048
        %v2073 = vpack.c.bf16 %v2053, %v2051
        %v2074 = vpack.c.bf16 %v2054, %v2052
        %v2075 = vpack.c.bf16 %v2057, %v2055
        %v2076 = vpack.c.bf16 %v2058, %v2056
        %v2077 = vpack.c.bf16 %v2061, %v2059
        %v2078 = vpack.c.bf16 %v2062, %v2060
        %v2079 = vld [vmem:[#allocation4] sm:$0xf]
        %v2080 = vld [vmem:[#allocation4 + $0x4] sm:$0xf]
        %v2081 = vld [vmem:[#allocation4 + $0x8] sm:$0xf]
        %v2082 = vld [vmem:[#allocation4 + $0xc] sm:$0xf]
        %v2083 = vld [vmem:[#allocation4 + $0x10] sm:$0xf]
        %v2084 = vld [vmem:[#allocation4 + $0x14] sm:$0xf]
        %v2085 = vld [vmem:[#allocation4 + $0x18] sm:$0xf]
        %v2086 = vld [vmem:[#allocation4 + $0x1c] sm:$0xf]
        %v2087 = vld [vmem:[#allocation4 + $0x20] sm:$0xf]
        %v2088 = vld [vmem:[#allocation4 + $0x24] sm:$0xf]
        %v2089 = vld [vmem:[#allocation4 + $0x28] sm:$0xf]
        %v2090 = vld [vmem:[#allocation4 + $0x2c] sm:$0xf]
        %v2091 = vld [vmem:[#allocation4 + $0x30] sm:$0xf]
        %v2092 = vld [vmem:[#allocation4 + $0x34] sm:$0xf]
        %v2093 = vld [vmem:[#allocation4 + $0x38] sm:$0xf]
        %v2094 = vld [vmem:[#allocation4 + $0x3c] sm:$0xf]
        %v2095 = vld [vmem:[#allocation4 + $0x40] sm:$0xf]
        %v2096 = vld [vmem:[#allocation4 + $0x44] sm:$0xf]
        %v2097 = vld [vmem:[#allocation4 + $0x48] sm:$0xf]
        %v2098 = vld [vmem:[#allocation4 + $0x4c] sm:$0xf]
        %v2099 = vld [vmem:[#allocation4 + $0x50] sm:$0xf]
        %v2100 = vld [vmem:[#allocation4 + $0x54] sm:$0xf]
        %v2101 = vld [vmem:[#allocation4 + $0x58] sm:$0xf]
        %v2102 = vld [vmem:[#allocation4 + $0x5c] sm:$0xf]
        %v2103 = vld [vmem:[#allocation4 + $0x60] sm:$0xf]
        %v2104 = vld [vmem:[#allocation4 + $0x64] sm:$0xf]
        %v2105 = vld [vmem:[#allocation4 + $0x68] sm:$0xf]
        %v2106 = vld [vmem:[#allocation4 + $0x6c] sm:$0xf]
        %v2107 = vld [vmem:[#allocation4 + $0x70] sm:$0xf]
        %v2108 = vld [vmem:[#allocation4 + $0x74] sm:$0xf]
        %v2109 = vld [vmem:[#allocation4 + $0x78] sm:$0xf]
        %v2110 = vld [vmem:[#allocation4 + $0x7c] sm:$0xf]
        %v2111 = vld [vmem:[%s6] sm:$0x1]
        %v2113 = vperm.slane %v2111, 0
        %v2147 = vunpack.c.l.b16 %v2079
        %v2148 = vunpack.c.l.b16 %v2080
        %v2149 = vunpack.c.l.b16 %v2081
        %v2150 = vunpack.c.l.b16 %v2082
        %v2151 = vunpack.c.l.b16 %v2083
        %v2152 = vunpack.c.l.b16 %v2084
        %v2153 = vunpack.c.l.b16 %v2085
        %v2154 = vunpack.c.l.b16 %v2086
        %v2155 = vunpack.c.l.b16 %v2087
        %v2156 = vunpack.c.l.b16 %v2088
        %v2157 = vunpack.c.l.b16 %v2089
        %v2158 = vunpack.c.l.b16 %v2090
        %v2159 = vunpack.c.l.b16 %v2091
        %v2160 = vunpack.c.l.b16 %v2092
        %v2161 = vunpack.c.l.b16 %v2093
        %v2162 = vunpack.c.l.b16 %v2094
        %v2163 = vunpack.c.l.b16 %v2095
        %v2164 = vunpack.c.l.b16 %v2096
        %v2165 = vunpack.c.l.b16 %v2097
        %v2166 = vunpack.c.l.b16 %v2098
        %v2167 = vunpack.c.l.b16 %v2099
        %v2168 = vunpack.c.l.b16 %v2100
        %v2169 = vunpack.c.l.b16 %v2101
        %v2170 = vunpack.c.l.b16 %v2102
        %v2171 = vunpack.c.l.b16 %v2103
        %v2172 = vunpack.c.l.b16 %v2104
        %v2173 = vunpack.c.l.b16 %v2105
        %v2174 = vunpack.c.l.b16 %v2106
        %v2175 = vunpack.c.l.b16 %v2107
        %v2176 = vunpack.c.l.b16 %v2108
        %v2177 = vunpack.c.l.b16 %v2109
        %v2178 = vunpack.c.l.b16 %v2110
        %v2179 = vpack.c.b16 %v2148, %v2147
        %v2180 = vpack.c.b16 %v2150, %v2149
        %v2181 = vpack.c.b16 %v2152, %v2151
        %v2182 = vpack.c.b16 %v2154, %v2153
        %v2183 = vpack.c.b16 %v2156, %v2155
        %v2184 = vpack.c.b16 %v2158, %v2157
        %v2185 = vpack.c.b16 %v2160, %v2159
        %v2186 = vpack.c.b16 %v2162, %v2161
        %v2187 = vpack.c.b16 %v2164, %v2163
        %v2188 = vpack.c.b16 %v2166, %v2165
        %v2189 = vpack.c.b16 %v2168, %v2167
        %v2190 = vpack.c.b16 %v2170, %v2169
        %v2191 = vpack.c.b16 %v2172, %v2171
        %v2192 = vpack.c.b16 %v2174, %v2173
        %v2193 = vpack.c.b16 %v2176, %v2175
        %v2194 = vpack.c.b16 %v2178, %v2177
        %2211 = vmatpush.bf16.msra.mxu0 %v2186
        %2212 = vmatpush.bf16.msra.mxu0 %v2185
        %2213 = vmatpush.bf16.msra.mxu0 %v2184
        %2214 = vmatpush.bf16.msra.mxu0 %v2183
        %2215 = vmatpush.bf16.msra.mxu0 %v2182
        %2216 = vmatpush.bf16.msra.mxu0 %v2181
        %2217 = vmatpush.bf16.msra.mxu0 %v2180
        %2218 = vmatpush.bf16.msra.mxu0 %v2179
        %2219 = vmatmul.bf16.gmra.mxu0 %v2063
        %v2220 = vpop.f32.mrf.mxu0
        %v2221 = vadd.f32 %v2113, %v2220
        %v2222 = vpop.f32.mrf.mxu0
        %v2223 = vadd.f32 %v2113, %v2222
        %2224 = vmatmul.bf16.gmra.mxu0 %v2065
        %v2225 = vpop.f32.mrf.mxu0
        %v2226 = vadd.f32 %v2113, %v2225
        %v2227 = vpop.f32.mrf.mxu0
        %v2228 = vadd.f32 %v2113, %v2227
        %2229 = vmatmul.bf16.gmra.mxu0 %v2067
        %v2230 = vpop.f32.mrf.mxu0
        %v2231 = vadd.f32 %v2113, %v2230
        %v2232 = vpop.f32.mrf.mxu0
        %v2233 = vadd.f32 %v2113, %v2232
        %2234 = vmatmul.bf16.gmra.mxu0 %v2069
        %v2235 = vpop.f32.mrf.mxu0
        %v2236 = vadd.f32 %v2113, %v2235
        %v2237 = vpop.f32.mrf.mxu0
        %v2238 = vadd.f32 %v2113, %v2237
        %2239 = vmatmul.bf16.gmra.mxu0 %v2071
        %v2240 = vpop.f32.mrf.mxu0
        %v2241 = vadd.f32 %v2113, %v2240
        %v2242 = vpop.f32.mrf.mxu0
        %v2243 = vadd.f32 %v2113, %v2242
        %2244 = vmatmul.bf16.gmra.mxu0 %v2073
        %v2245 = vpop.f32.mrf.mxu0
        %v2246 = vadd.f32 %v2113, %v2245
        %v2247 = vpop.f32.mrf.mxu0
        %v2248 = vadd.f32 %v2113, %v2247
        %2249 = vmatmul.bf16.gmra.mxu0 %v2075
        %v2250 = vpop.f32.mrf.mxu0
        %v2251 = vadd.f32 %v2113, %v2250
        %v2252 = vpop.f32.mrf.mxu0
        %v2253 = vadd.f32 %v2113, %v2252
        %2254 = vmatmul.bf16.gmra.mxu0 %v2077
        %v2255 = vpop.f32.mrf.mxu0
        %v2256 = vadd.f32 %v2113, %v2255
        %v2257 = vpop.f32.mrf.mxu0
        %v2258 = vadd.f32 %v2113, %v2257
        %2259 = vdwg.mxu0
        %2260 = vmatpush.bf16.msra.mxu0 %v2194
        %2261 = vmatpush.bf16.msra.mxu0 %v2193
        %2262 = vmatpush.bf16.msra.mxu0 %v2192
        %2263 = vmatpush.bf16.msra.mxu0 %v2191
        %2264 = vmatpush.bf16.msra.mxu0 %v2190
        %2265 = vmatpush.bf16.msra.mxu0 %v2189
        %2266 = vmatpush.bf16.msra.mxu0 %v2188
        %2267 = vmatpush.bf16.msra.mxu0 %v2187
        %2268 = vmatmul.bf16.gmra.mxu0 %v2064
        %v2269 = vpop.f32.mrf.mxu0
        %v2270 = vadd.f32 %v2221, %v2269
        %v2271 = vpop.f32.mrf.mxu0
        %v2272 = vadd.f32 %v2223, %v2271
        %2273 = vmatmul.bf16.gmra.mxu0 %v2066
        %v2274 = vpop.f32.mrf.mxu0
        %v2275 = vadd.f32 %v2226, %v2274
        %v2276 = vpop.f32.mrf.mxu0
        %v2277 = vadd.f32 %v2228, %v2276
        %2278 = vmatmul.bf16.gmra.mxu0 %v2068
        %v2279 = vpop.f32.mrf.mxu0
        %v2280 = vadd.f32 %v2231, %v2279
        %v2281 = vpop.f32.mrf.mxu0
        %v2282 = vadd.f32 %v2233, %v2281
        %2283 = vmatmul.bf16.gmra.mxu0 %v2070
        %v2284 = vpop.f32.mrf.mxu0
        %v2285 = vadd.f32 %v2236, %v2284
        %v2286 = vpop.f32.mrf.mxu0
        %v2287 = vadd.f32 %v2238, %v2286
        %2288 = vmatmul.bf16.gmra.mxu0 %v2072
        %v2289 = vpop.f32.mrf.mxu0
        %v2290 = vadd.f32 %v2241, %v2289
        %v2291 = vpop.f32.mrf.mxu0
        %v2292 = vadd.f32 %v2243, %v2291
        %2293 = vmatmul.bf16.gmra.mxu0 %v2074
        %v2294 = vpop.f32.mrf.mxu0
        %v2295 = vadd.f32 %v2246, %v2294
        %v2296 = vpop.f32.mrf.mxu0
        %v2297 = vadd.f32 %v2248, %v2296
        %2298 = vmatmul.bf16.gmra.mxu0 %v2076
        %v2299 = vpop.f32.mrf.mxu0
        %v2300 = vadd.f32 %v2251, %v2299
        %v2301 = vpop.f32.mrf.mxu0
        %v2302 = vadd.f32 %v2253, %v2301
        %2303 = vmatmul.bf16.gmra.mxu0 %v2078
        %v2304 = vpop.f32.mrf.mxu0
        %v2305 = vadd.f32 %v2256, %v2304
        %v2306 = vpop.f32.mrf.mxu0
        %v2307 = vadd.f32 %v2258, %v2306
        %2308 = vdwg.mxu0
        %v2309 = vpack.c.bf16 %v2270, %v2270
        %v2310 = vpack.c.bf16 %v2272, %v2272
        %v2311 = vpack.c.bf16 %v2275, %v2275
        %v2312 = vpack.c.bf16 %v2277, %v2277
        %v2313 = vpack.c.bf16 %v2280, %v2280
        %v2314 = vpack.c.bf16 %v2282, %v2282
        %v2315 = vpack.c.bf16 %v2285, %v2285
        %v2316 = vpack.c.bf16 %v2287, %v2287
        %v2317 = vpack.c.bf16 %v2290, %v2290
        %v2318 = vpack.c.bf16 %v2292, %v2292
        %v2319 = vpack.c.bf16 %v2295, %v2295
        %v2320 = vpack.c.bf16 %v2297, %v2297
        %v2321 = vpack.c.bf16 %v2300, %v2300
        %v2322 = vpack.c.bf16 %v2302, %v2302
        %v2323 = vpack.c.bf16 %v2305, %v2305
        %v2324 = vpack.c.bf16 %v2307, %v2307
        %2325 = vst [vmem:[%s317] sm:$0xf] %v2309
        %2326 = vst [vmem:[%s317 + $0x4] sm:$0xf] %v2310
        %2327 = vst [vmem:[%s317 + $0x8] sm:$0xf] %v2311
        %2328 = vst [vmem:[%s317 + $0xc] sm:$0xf] %v2312
        %2329 = vst [vmem:[%s317 + $0x10] sm:$0xf] %v2313
        %2330 = vst [vmem:[%s317 + $0x14] sm:$0xf] %v2314
        %2331 = vst [vmem:[%s317 + $0x18] sm:$0xf] %v2315
        %2332 = vst [vmem:[%s317 + $0x1c] sm:$0xf] %v2316
        %2333 = vst [vmem:[%s317 + $0x20] sm:$0xf] %v2317
        %2334 = vst [vmem:[%s317 + $0x24] sm:$0xf] %v2318
        %2335 = vst [vmem:[%s317 + $0x28] sm:$0xf] %v2319
        %2336 = vst [vmem:[%s317 + $0x2c] sm:$0xf] %v2320
        %2337 = vst [vmem:[%s317 + $0x30] sm:$0xf] %v2321
        %2338 = vst [vmem:[%s317 + $0x34] sm:$0xf] %v2322
        %2339 = vst [vmem:[%s317 + $0x38] sm:$0xf] %v2323
        %2340 = vst [vmem:[%s317 + $0x3c] sm:$0xf] %v2324
        %s2341 = smul.u32 16, %s20
        %p2342 = scmp.lt.s32.totalorder %s2341, 31
        %s2343 = scalar_select %p2342, %s2341, 31
        %s2344 = smul.addr %s2343, 4
        %s2345 = scalar_lea.vmem %s7, %s2344
        // Predicated region
        $region57: #{fffc_forward.1} parent=47 // pred_check
          %p2346 = pneg %p190
        $region58: #{fffc_forward.1} parent=47 // pred_check_branch
          %2348 = sbr.rel (%p2346) target = $region60
        $region59: #{fffc_forward.1} parent=47 // pred_region
          %s2349 = smul.u32 16, %s20
        $region60: #{fffc_forward.1} parent=47 // pred_fallthru
          _
      $region48: #{fffc_forward.1} parent=5 // pred_fallthru
        _
      %p2350 = scmp.le.s32.totalorder 2, %s15
      // Predicated region
      $region61: #{fffc_forward.1} parent=5 // pred_check
        %p2351 = pneg %p2350
      $region62: #{fffc_forward.1} parent=5 // pred_check_branch
        %2353 = sbr.rel (%p2351) target = $region64
      $region63: #{fffc_forward.1} parent=5 // pred_region
        %s2354 = ssub.s32 %s15, 2
        // Predicated region
        $region65: #{fffc_forward.1} parent=63 // pred_check
          %p2355 = pneg %p196
        $region66: #{fffc_forward.1} parent=63 // pred_check_branch
          %2357 = sbr.rel (%p2355) target = $region68
        $region67: #{fffc_forward.1} parent=63 // pred_region
          %s2358 = smul.u32 16, %s21
          %p2359 = scmp.lt.s32.totalorder %s2358, 31
          %s2360 = scalar_select %p2359, %s2358, 31
          %s2361 = smul.addr %s2360, 4
          %s2362 = scalar_lea.vmem %s7, %s2361
        $region68: #{fffc_forward.1} parent=63 // pred_fallthru
          _
      $region64: #{fffc_forward.1} parent=5 // pred_fallthru
        _
    $region6: #{fffc_forward.1} parent=1 // loop_footer
      %s19 = sadd.s32 1, %s15
    $region7: #{fffc_forward.1} parent=1 // loop_footer_branch
      %14 = sbr.rel target = $region3
    $region8: #{fffc_forward.1} parent=1 // loop_exit
      _
    %2363 = vsyncpa [#allocation3], 1
    %s2364 = scalar_lea.sflag [#allocation3], 1
    %2365 = vsyncpa %s2364, 1
    %2366 = vsyncpa [#allocation5], 1

</llo_original>
